<compile_context>
chip_gen: v7x
topology: tpu7x:2x2x1
jax: 0.10.0
libtpu: 0.0.40
codegen_flags: <defaults>
</compile_context>

<pallas_src>
import math

import jax
import jax.numpy as jnp
from jax.experimental import pallas as pl
from jax.experimental.pallas import tpu as pltpu

_VMEM_LIMIT_BYTES = 32 * 1024 * 1024   # safe on v5e/v6e (128 MiB) and v7x (64 MiB)
_NEG_INF = -1e30                       # finite "minus infinity" (avoids inf-inf NaNs)


def _pick_tile(dim, candidates):
    """Largest candidate tile that evenly divides `dim`, else the full dim."""
    for c in candidates:
        if dim >= c and dim % c == 0:
            return c
    return dim


def _largest_divisor_leq(n, cap):
    for d in range(min(n, cap), 0, -1):
        if n % d == 0:
            return d
    return 1


# ---------------- tiled linear (x @ w + b), bf16 operands / fp32 accumulate ----

def _linear_kernel(x_ref, w_ref, b_ref, o_ref, acc_ref):
    kk = pl.program_id(2)

    @pl.when(kk == 0)
    def _():
        acc_ref[...] = jnp.zeros_like(acc_ref)

    # Operands are already bf16 (cast once outside the kernel); fp32 accumulate.
    acc_ref[...] += jnp.dot(x_ref[...], w_ref[...],
                            preferred_element_type=jnp.float32)

    @pl.when(kk == pl.num_programs(2) - 1)
    def _():
        # fp32 bias fused into the epilogue while data is resident in vregs.
        o_ref[...] = (acc_ref[...] + b_ref[...]).astype(o_ref.dtype)


def _linear(x2d, w, b, out_dtype):
    """y = x2d @ w + b.  x2d/w are bf16, b is fp32, w already (Din, Dout)."""
    M, Din = x2d.shape
    Dout = w.shape[1]
    tm = _pick_tile(M, (512, 256, 128))
    tn = _pick_tile(Dout, (512, 256, 128))
    tk = _pick_tile(Din, (512, 256, 128))
    grid = (M // tm, Dout // tn, Din // tk)

    cost = pl.CostEstimate(
        flops=2 * M * Dout * Din,
        transcendentals=0,
        # bf16 operands; x re-read per N tile, w re-read per M tile.
        bytes_accessed=(2 * M * Din * (Dout // tn)
                        + 2 * Din * Dout * (M // tm)
                        + 4 * Dout
                        + jnp.dtype(out_dtype).itemsize * M * Dout),
    )

    return pl.pallas_call(
        _linear_kernel,
        out_shape=jax.ShapeDtypeStruct((M, Dout), out_dtype),
        grid_spec=pltpu.PrefetchScalarGridSpec(
            num_scalar_prefetch=0,
            grid=grid,
            in_specs=[
                pl.BlockSpec((tm, tk), lambda i, j, kk: (i, kk)),
                pl.BlockSpec((tk, tn), lambda i, j, kk: (kk, j)),
                pl.BlockSpec((1, tn), lambda i, j, kk: (0, j)),
            ],
            out_specs=pl.BlockSpec((tm, tn), lambda i, j, kk: (i, j)),
            scratch_shapes=[pltpu.VMEM((tm, tn), jnp.float32)],
        ),
        compiler_params=pltpu.CompilerParams(
            dimension_semantics=("parallel", "parallel", "arbitrary"),
            vmem_limit_bytes=_VMEM_LIMIT_BYTES,
        ),
        cost_estimate=cost,
    )(x2d, w, b.reshape(1, Dout))


# ---------------- flash attention (online softmax over KV tiles) ---------------

def _make_flash_kernel(causal, tq, tk):
    def kernel(q_ref, k_ref, v_ref, o_ref, m_sc, l_sc, acc_sc):
        qi = pl.program_id(1)
        ki = pl.program_id(2)

        @pl.when(ki == 0)
        def _init():
            m_sc[...] = jnp.full_like(m_sc, _NEG_INF)
            l_sc[...] = jnp.zeros_like(l_sc)
            acc_sc[...] = jnp.zeros_like(acc_sc)

        def _update():
            # 1/sqrt(dh) is folded into the q projection weights; operands are
            # already bf16.  Contraction over the shared last dim (no k.T).
            s = jnp.einsum("hqd,hkd->hqk", q_ref[...], k_ref[...],
                           preferred_element_type=jnp.float32)   # (hb, tq, tk)
            if causal:
                row = qi * tq + jax.lax.broadcasted_iota(jnp.int32, s.shape, 1)
                col = ki * tk + jax.lax.broadcasted_iota(jnp.int32, s.shape, 2)
                s = jnp.where(col > row, _NEG_INF, s)
            m_prev = m_sc[...]
            m_new = jnp.maximum(m_prev, jnp.max(s, axis=-1, keepdims=True))
            alpha = jnp.exp(m_prev - m_new)
            p = jnp.exp(s - m_new)
            l_sc[...] = alpha * l_sc[...] + jnp.sum(p, axis=-1, keepdims=True)
            acc_sc[...] = alpha * acc_sc[...] + jnp.einsum(
                "hqk,hkd->hqd", p.astype(v_ref.dtype), v_ref[...],
                preferred_element_type=jnp.float32)
            m_sc[...] = m_new

        if causal:
            # TODO(synk): also gate the K/V DMAs (index_map remap) so fully
            # masked KV tiles are not fetched, not just compute-skipped.
            @pl.when(ki * tk <= qi * tq + (tq - 1))
            def _():
                _update()
        else:
            _update()

        @pl.when(ki == pl.num_programs(2) - 1)
        def _fin():
            o_ref[...] = (acc_sc[...] *
                          pl.reciprocal(l_sc[...], approx=True)).astype(o_ref.dtype)

    return kernel


def _attention(q, k, v, causal):
    """q, k, v: (B*H, S, dh) bf16 -> (B*H, S, dh) bf16 via online softmax."""
    BH, S, dh = q.shape
    tq = _pick_tile(S, (128,))
    tk = _pick_tile(S, (256, 128))

    # Heads per grid step: batch heads when dh < 128 (capped so the fp32 score
    # block hb*tq*tk stays modest).  Heads are independent, so any divisor of
    # B*H is correct.
    target_hb = 1 if dh >= 128 else max(1, min(8, 128 // dh))
    hb = _largest_divisor_leq(BH, target_hb)
    grid = (BH // hb, S // tq, S // tk)   # keep leading 'parallel' axis >= 2
                                          # where possible (v7x has 2 TCs).

    cost = pl.CostEstimate(
        flops=4 * BH * S * S * dh,
        transcendentals=BH * S * S,
        # bf16 q/o read/written once; K and V re-fetched once per Q tile.
        bytes_accessed=2 * BH * S * dh * (2 + 2 * (S // tq)),
    )

    return pl.pallas_call(
        _make_flash_kernel(causal, tq, tk),
        out_shape=jax.ShapeDtypeStruct((BH, S, dh), q.dtype),
        grid_spec=pltpu.PrefetchScalarGridSpec(
            num_scalar_prefetch=0,
            grid=grid,
            in_specs=[
                pl.BlockSpec((hb, tq, dh), lambda g, qi, ki: (g, qi, 0)),
                pl.BlockSpec((hb, tk, dh), lambda g, qi, ki: (g, ki, 0)),
                pl.BlockSpec((hb, tk, dh), lambda g, qi, ki: (g, ki, 0)),
            ],
            out_specs=pl.BlockSpec((hb, tq, dh), lambda g, qi, ki: (g, qi, 0)),
            scratch_shapes=[
                pltpu.VMEM((hb, tq, 1), jnp.float32),    # running max
                pltpu.VMEM((hb, tq, 1), jnp.float32),    # running sum
                pltpu.VMEM((hb, tq, dh), jnp.float32),   # output accumulator
            ],
        ),
        compiler_params=pltpu.CompilerParams(
            dimension_semantics=("parallel", "parallel", "arbitrary"),
            vmem_limit_bytes=_VMEM_LIMIT_BYTES,
        ),
        cost_estimate=cost,
    )(q, k, v)


# ---------------- params & module wrapper --------------------------------------

def init_self_attention_params(key, n_heads, d_embed):
    """PyTorch-layout params: w_in (3D, D), w_out (D, D) (out_features, in_features)."""
    k1, k2, k3, k4 = jax.random.split(key, 4)
    lim_in = 1.0 / math.sqrt(d_embed)
    w_in = jax.random.uniform(k1, (3 * d_embed, d_embed), jnp.float32, -lim_in, lim_in)
    b_in = jax.random.uniform(k2, (3 * d_embed,), jnp.float32, -lim_in, lim_in)
    w_out = jax.random.uniform(k3, (d_embed, d_embed), jnp.float32, -lim_in, lim_in)
    b_out = jax.random.uniform(k4, (d_embed,), jnp.float32, -lim_in, lim_in)
    return dict(w_in=w_in, b_in=b_in, w_out=w_out, b_out=b_out)


def prepare_params(params, n_heads):
    """One-time prep: transpose to (Din, Dout), cast weights to bf16, and fold
    the 1/sqrt(d_head) attention scale into the q rows of in_proj."""
    d_embed = params["w_out"].shape[0]
    dh = d_embed // n_heads
    scale = 1.0 / math.sqrt(dh)
    row_scale = jnp.concatenate(
        [jnp.full((d_embed,), scale, jnp.float32),
         jnp.ones((2 * d_embed,), jnp.float32)])
    w_in_scaled = params["w_in"] * row_scale[:, None]
    b_in_scaled = params["b_in"] * row_scale
    # TODO(synk): optional v7x-only path — fp8 weight-only quantization with
    # per-output-channel scales for the two projections.
    return dict(
        w_in_t=w_in_scaled.T.astype(jnp.bfloat16),        # (D, 3D) bf16
        b_in=b_in_scaled.astype(jnp.float32),              # (3D,)   fp32
        w_out_t=params["w_out"].T.astype(jnp.bfloat16),    # (D, D)  bf16
        b_out=params["b_out"].astype(jnp.float32),          # (D,)    fp32
    )


def self_attention_forward(prep, x, n_heads, causal_mask=False):
    B, S, D = x.shape
    assert D % n_heads == 0
    dh = D // n_heads

    # in_proj: tiled Pallas matmul, bf16 operands, fused fp32 bias, bf16 output.
    x2d = x.reshape(B * S, D).astype(jnp.bfloat16)
    qkv = _linear(x2d, prep["w_in_t"], prep["b_in"], out_dtype=jnp.bfloat16)  # (B*S, 3D)

    # TODO(synk): fold this head split/merge into the attention BlockSpec
    # index_maps (needs lane-dense hb*dh blocks / in-kernel head layout); the
    # transposes below are bf16 now, halving their HBM cost vs. the fp32 version.
    qkv = qkv.reshape(B, S, 3, n_heads, dh)
    qh, kh, vh = [
        qkv[:, :, i].transpose(0, 2, 1, 3).reshape(B * n_heads, S, dh)
        for i in range(3)
    ]

    # attention hot path (flash / online softmax, heads batched per grid step).
    oh = _attention(qh, kh, vh, causal_mask)  # (B*H, S, dh) bf16

    out = (oh.reshape(B, n_heads, S, dh)
             .transpose(0, 2, 1, 3)
             .reshape(B * S, D))

    # out_proj: tiled Pallas matmul, fp32 output to match the module's dtype.
    y = _linear(out, prep["w_out_t"], prep["b_out"], out_dtype=jnp.float32)
    return y.reshape(B, S, D)


# ---------------- reference (pure JAX, fp32) ------------------------------------

def _reference(params, x, n_heads, causal_mask=False):
    B, S, D = x.shape
    dh = D // n_heads
    qkv = x @ params["w_in"].T + params["b_in"]
    q, k, v = jnp.split(qkv, 3, axis=-1)

    def th(t):
        return t.reshape(B, S, n_heads, dh).transpose(0, 2, 1, 3)

    q, k, v = th(q), th(k), th(v)
    s = jnp.einsum("bhqd,bhkd->bhqk", q, k) / math.sqrt(dh)
    if causal_mask:
        mask = jnp.triu(jnp.ones((S, S), bool), 1)
        s = jnp.where(mask, -jnp.inf, s)
    p = jax.nn.softmax(s, axis=-1)
    o = jnp.einsum("bhqk,bhkd->bhqd", p, v).transpose(0, 2, 1, 3).reshape(B, S, D)
    return o @ params["w_out"].T + params["b_out"]


if __name__ == "__main__":
    B, S, D, H = 2, 8, 32, 4   # batch=2, seq=8, d_embed=32, n_heads=4

    key = jax.random.PRNGKey(0)
    kx, kp = jax.random.split(key)
    x = jax.random.normal(kx, (B, S, D), jnp.float32)
    params = init_self_attention_params(kp, H, D)
    prep = prepare_params(params, H)      # one-time weight transpose/cast/scale-fold

    fwd = jax.jit(self_attention_forward, static_argnums=(2, 3))
    y = fwd(prep, x, H, False)
    y = jax.block_until_ready(y)

    y_ref = _reference(params, x, H, causal_mask=False)
    assert y.shape == (B, S, D)
    # bf16 storage/MXU operands + approx reciprocal => loose tolerance vs fp32 ref.
    assert jnp.allclose(y, y_ref, atol=5e-2, rtol=5e-2), "mismatch vs reference"

    print("KERNEL_OK")
</pallas_src>

<mosaic_0001>
module attributes {stable_mosaic.version = 11 : i64} {
  func.func @_linear_kernel(%arg0: i32, %arg1: i32, %arg2: i32, %arg3: memref<16x32xbf16, #tpu.memory_space<vmem>>, %arg4: memref<32x96xbf16, #tpu.memory_space<vmem>>, %arg5: memref<1x96xf32, #tpu.memory_space<vmem>>, %arg6: memref<16x96xbf16, #tpu.memory_space<vmem>>, %arg7: memref<16x96xf32, #tpu.memory_space<vmem>>) attributes {dimension_semantics = [#tpu.dimension_semantics<parallel>, #tpu.dimension_semantics<parallel>, #tpu.dimension_semantics<arbitrary>], iteration_bounds = array<i64: 1, 1, 1>, scalar_prefetch = 0 : i64, scratch_operands = 1 : i64, tpu.core_type = #tpu.core_type<tc>, window_params = [{transform_indices = @transform_0, window_bounds = array<i64: 16, 32>}, {transform_indices = @transform_1, window_bounds = array<i64: 32, 96>}, {transform_indices = @transform_2, window_bounds = array<i64: 1, 96>}, {transform_indices = @transform_3, window_bounds = array<i64: 16, 96>}]} {
    %c0_i32 = arith.constant 0 : i32
    %0 = arith.cmpi eq, %arg2, %c0_i32 : i32
    %1 = arith.extui %0 : i1 to i32
    %c0_i32_0 = arith.constant 0 : i32
    %2 = arith.cmpi ne, %1, %c0_i32_0 : i32
    scf.if %2 {
      %cst_10 = arith.constant 0.000000e+00 : f32
      %12 = vector.broadcast %cst_10 : f32 to vector<16x96xf32>
      %c0_11 = arith.constant 0 : index
      %c0_12 = arith.constant 0 : index
      %13 = vector.load %arg7[%c0_11, %c0_12] : memref<16x96xf32, #tpu.memory_space<vmem>>, vector<16x96xf32>
      tpu.vector_store %arg7[%c0_11, %c0_12], %12 {strides = array<i32>} : memref<16x96xf32, #tpu.memory_space<vmem>>, vector<16x96xf32>,
    } else {
    }
    %c0 = arith.constant 0 : index
    %c0_1 = arith.constant 0 : index
    %3 = vector.load %arg7[%c0, %c0_1] : memref<16x96xf32, #tpu.memory_space<vmem>>, vector<16x96xf32>
    %c0_2 = arith.constant 0 : index
    %c0_3 = arith.constant 0 : index
    %4 = vector.load %arg3[%c0_2, %c0_3] : memref<16x32xbf16, #tpu.memory_space<vmem>>, vector<16x32xbf16>
    %c0_4 = arith.constant 0 : index
    %c0_5 = arith.constant 0 : index
    %5 = vector.load %arg4[%c0_4, %c0_5] : memref<32x96xbf16, #tpu.memory_space<vmem>>, vector<32x96xbf16>
    %cst = arith.constant dense<0.000000e+00> : vector<16x96xf32>
    %6 = tpu.matmul %4, %5, %cst {dimension_numbers = #tpu.dot_dimension_numbers<[1], [0], [0], [1], [0, 0, 1, 1], [], []>} : vector<16x32xbf16>, vector<32x96xbf16>, vector<16x96xf32> -> vector<16x96xf32>
    %7 = arith.addf %3, %6 : vector<16x96xf32>
    %c0_6 = arith.constant 0 : index
    %c0_7 = arith.constant 0 : index
    %8 = vector.load %arg7[%c0_6, %c0_7] : memref<16x96xf32, #tpu.memory_space<vmem>>, vector<16x96xf32>
    tpu.vector_store %arg7[%c0_6, %c0_7], %7 {strides = array<i32>} : memref<16x96xf32, #tpu.memory_space<vmem>>, vector<16x96xf32>,
    %c0_i32_8 = arith.constant 0 : i32
    %9 = arith.cmpi eq, %arg2, %c0_i32_8 : i32
    %10 = arith.extui %9 : i1 to i32
    %c0_i32_9 = arith.constant 0 : i32
    %11 = arith.cmpi ne, %10, %c0_i32_9 : i32
    scf.if %11 {
      %c0_10 = arith.constant 0 : index
      %c0_11 = arith.constant 0 : index
      %12 = vector.load %arg7[%c0_10, %c0_11] : memref<16x96xf32, #tpu.memory_space<vmem>>, vector<16x96xf32>
      %c0_12 = arith.constant 0 : index
      %c0_13 = arith.constant 0 : index
      %13 = vector.load %arg5[%c0_12, %c0_13] : memref<1x96xf32, #tpu.memory_space<vmem>>, vector<1x96xf32>
      %14 = vector.broadcast %13 : vector<1x96xf32> to vector<16x96xf32>
      %15 = arith.addf %12, %14 : vector<16x96xf32>
      %16 = arith.truncf %15 : vector<16x96xf32> to vector<16x96xbf16>
      %c0_14 = arith.constant 0 : index
      %c0_15 = arith.constant 0 : index
      %17 = vector.load %arg6[%c0_14, %c0_15] : memref<16x96xbf16, #tpu.memory_space<vmem>>, vector<16x96xbf16>
      tpu.vector_store %arg6[%c0_14, %c0_15], %16 {strides = array<i32>} : memref<16x96xbf16, #tpu.memory_space<vmem>>, vector<16x96xbf16>,
    } else {
    }
    return
  }
  func.func @transform_0(%arg0: i32, %arg1: i32, %arg2: i32) -> (i32, i32) {
    %c0_i32 = arith.constant 0 : i32
    return %arg0, %arg2 : i32, i32
  }
  func.func @transform_1(%arg0: i32, %arg1: i32, %arg2: i32) -> (i32, i32) {
    %c0_i32 = arith.constant 0 : i32
    return %arg2, %arg1 : i32, i32
  }
  func.func @transform_2(%arg0: i32, %arg1: i32, %arg2: i32) -> (i32, i32) {
    %c0_i32 = arith.constant 0 : i32
    %c0_i32_0 = arith.constant 0 : i32
    return %c0_i32, %arg1 : i32, i32
  }
  func.func @transform_3(%arg0: i32, %arg1: i32, %arg2: i32) -> (i32, i32) {
    %c0_i32 = arith.constant 0 : i32
    return %arg0, %arg1 : i32, i32
  }
}

module attributes {stable_mosaic.version = 11 : i64} {
  func.func @kernel(%arg0: i32, %arg1: i32, %arg2: i32, %arg3: memref<8x8x8xbf16, #tpu.memory_space<vmem>>, %arg4: memref<8x8x8xbf16, #tpu.memory_space<vmem>>, %arg5: memref<8x8x8xbf16, #tpu.memory_space<vmem>>, %arg6: memref<8x8x8xbf16, #tpu.memory_space<vmem>>, %arg7: memref<8x8x1xf32, #tpu.memory_space<vmem>>, %arg8: memref<8x8x1xf32, #tpu.memory_space<vmem>>, %arg9: memref<8x8x8xf32, #tpu.memory_space<vmem>>) attributes {dimension_semantics = [#tpu.dimension_semantics<parallel>, #tpu.dimension_semantics<parallel>, #tpu.dimension_semantics<arbitrary>], iteration_bounds = array<i64: 1, 1, 1>, scalar_prefetch = 0 : i64, scratch_operands = 3 : i64, tpu.core_type = #tpu.core_type<tc>, window_params = [{transform_indices = @transform_0, window_bounds = array<i64: 8, 8, 8>}, {transform_indices = @transform_1, window_bounds = array<i64: 8, 8, 8>}, {transform_indices = @transform_2, window_bounds = array<i64: 8, 8, 8>}, {transform_indices = @transform_3, window_bounds = array<i64: 8, 8, 8>}]} {
    %c0_i32 = arith.constant 0 : i32
    %0 = arith.cmpi eq, %arg2, %c0_i32 : i32
    %1 = arith.extui %0 : i1 to i32
    %c0_i32_0 = arith.constant 0 : i32
    %2 = arith.cmpi ne, %1, %c0_i32_0 : i32
    scf.if %2 {
      %cst_32 = arith.constant -1.000000e+30 : f32
      %33 = vector.broadcast %cst_32 : f32 to vector<8x8x1xf32>
      %c0_33 = arith.constant 0 : index
      %c0_34 = arith.constant 0 : index
      %c0_35 = arith.constant 0 : index
      %34 = vector.load %arg7[%c0_33, %c0_34, %c0_35] : memref<8x8x1xf32, #tpu.memory_space<vmem>>, vector<8x8x1xf32>
      tpu.vector_store %arg7[%c0_33, %c0_34, %c0_35], %33 {strides = array<i32>} : memref<8x8x1xf32, #tpu.memory_space<vmem>>, vector<8x8x1xf32>,
      %cst_36 = arith.constant 0.000000e+00 : f32
      %35 = vector.broadcast %cst_36 : f32 to vector<8x8x1xf32>
      %c0_37 = arith.constant 0 : index
      %c0_38 = arith.constant 0 : index
      %c0_39 = arith.constant 0 : index
      %36 = vector.load %arg8[%c0_37, %c0_38, %c0_39] : memref<8x8x1xf32, #tpu.memory_space<vmem>>, vector<8x8x1xf32>
      tpu.vector_store %arg8[%c0_37, %c0_38, %c0_39], %35 {strides = array<i32>} : memref<8x8x1xf32, #tpu.memory_space<vmem>>, vector<8x8x1xf32>,
      %cst_40 = arith.constant 0.000000e+00 : f32
      %37 = vector.broadcast %cst_40 : f32 to vector<8x8x8xf32>
      %c0_41 = arith.constant 0 : index
      %c0_42 = arith.constant 0 : index
      %c0_43 = arith.constant 0 : index
      %38 = vector.load %arg9[%c0_41, %c0_42, %c0_43] : memref<8x8x8xf32, #tpu.memory_space<vmem>>, vector<8x8x8xf32>
      tpu.vector_store %arg9[%c0_41, %c0_42, %c0_43], %37 {strides = array<i32>} : memref<8x8x8xf32, #tpu.memory_space<vmem>>, vector<8x8x8xf32>,
    } else {
    }
    %c0 = arith.constant 0 : index
    %c0_1 = arith.constant 0 : index
    %c0_2 = arith.constant 0 : index
    %3 = vector.load %arg3[%c0, %c0_1, %c0_2] : memref<8x8x8xbf16, #tpu.memory_space<vmem>>, vector<8x8x8xbf16>
    %c0_3 = arith.constant 0 : index
    %c0_4 = arith.constant 0 : index
    %c0_5 = arith.constant 0 : index
    %4 = vector.load %arg4[%c0_3, %c0_4, %c0_5] : memref<8x8x8xbf16, #tpu.memory_space<vmem>>, vector<8x8x8xbf16>
    "tpu.trace_start"() <{level = 10 : i32, message = "hqd,hkd->hqk"}> : () -> ()
    %cst = arith.constant dense<0.000000e+00> : vector<8x8x8xf32>
    %5 = tpu.matmul %3, %4, %cst {dimension_numbers = #tpu.dot_dimension_numbers<[2], [2], [1], [1], [0, 0, 0, 1, 1, 1], [0], [0]>} : vector<8x8x8xbf16>, vector<8x8x8xbf16>, vector<8x8x8xf32> -> vector<8x8x8xf32>
    "tpu.trace_stop"() : () -> ()
    %c0_6 = arith.constant 0 : index
    %c0_7 = arith.constant 0 : index
    %c0_8 = arith.constant 0 : index
    %6 = vector.load %arg7[%c0_6, %c0_7, %c0_8] : memref<8x8x1xf32, #tpu.memory_space<vmem>>, vector<8x8x1xf32>
    %cst_9 = arith.constant dense<0xFF800000> : vector<8x8xf32>
    %7 = vector.multi_reduction <maximumf>, %5, %cst_9 [2] : vector<8x8x8xf32> to vector<8x8xf32>
    %8 = vector.shape_cast %7 : vector<8x8xf32> to vector<8x8x1xf32>
    %9 = arith.maximumf %6, %8 : vector<8x8x1xf32>
    %10 = arith.subf %6, %9 : vector<8x8x1xf32>
    %11 = math.exp %10 : vector<8x8x1xf32>
    %12 = vector.broadcast %9 : vector<8x8x1xf32> to vector<8x8x8xf32>
    %13 = arith.subf %5, %12 : vector<8x8x8xf32>
    %14 = math.exp %13 : vector<8x8x8xf32>
    %c0_10 = arith.constant 0 : index
    %c0_11 = arith.constant 0 : index
    %c0_12 = arith.constant 0 : index
    %15 = vector.load %arg8[%c0_10, %c0_11, %c0_12] : memref<8x8x1xf32, #tpu.memory_space<vmem>>, vector<8x8x1xf32>
    %16 = arith.mulf %11, %15 : vector<8x8x1xf32>
    %cst_13 = arith.constant dense<0.000000e+00> : vector<8x8xf32>
    %17 = vector.multi_reduction <add>, %14, %cst_13 [2] : vector<8x8x8xf32> to vector<8x8xf32>
    %18 = vector.shape_cast %17 : vector<8x8xf32> to vector<8x8x1xf32>
    %19 = arith.addf %16, %18 : vector<8x8x1xf32>
    %c0_14 = arith.constant 0 : index
    %c0_15 = arith.constant 0 : index
    %c0_16 = arith.constant 0 : index
    %20 = vector.load %arg8[%c0_14, %c0_15, %c0_16] : memref<8x8x1xf32, #tpu.memory_space<vmem>>, vector<8x8x1xf32>
    tpu.vector_store %arg8[%c0_14, %c0_15, %c0_16], %19 {strides = array<i32>} : memref<8x8x1xf32, #tpu.memory_space<vmem>>, vector<8x8x1xf32>,
    %c0_17 = arith.constant 0 : index
    %c0_18 = arith.constant 0 : index
    %c0_19 = arith.constant 0 : index
    %21 = vector.load %arg9[%c0_17, %c0_18, %c0_19] : memref<8x8x8xf32, #tpu.memory_space<vmem>>, vector<8x8x8xf32>
    %22 = vector.broadcast %11 : vector<8x8x1xf32> to vector<8x8x8xf32>
    %23 = arith.mulf %22, %21 : vector<8x8x8xf32>
    %24 = arith.truncf %14 : vector<8x8x8xf32> to vector<8x8x8xbf16>
    %c0_20 = arith.constant 0 : index
    %c0_21 = arith.constant 0 : index
    %c0_22 = arith.constant 0 : index
    %25 = vector.load %arg5[%c0_20, %c0_21, %c0_22] : memref<8x8x8xbf16, #tpu.memory_space<vmem>>, vector<8x8x8xbf16>
    "tpu.trace_start"() <{level = 10 : i32, message = "hqk,hkd->hqd"}> : () -> ()
    %cst_23 = arith.constant dense<0.000000e+00> : vector<8x8x8xf32>
    %26 = tpu.matmul %24, %25, %cst_23 {dimension_numbers = #tpu.dot_dimension_numbers<[2], [1], [1], [2], [0, 0, 0, 1, 1, 2], [0], [0]>} : vector<8x8x8xbf16>, vector<8x8x8xbf16>, vector<8x8x8xf32> -> vector<8x8x8xf32>
    "tpu.trace_stop"() : () -> ()
    %27 = arith.addf %23, %26 : vector<8x8x8xf32>
    %c0_24 = arith.constant 0 : index
    %c0_25 = arith.constant 0 : index
    %c0_26 = arith.constant 0 : index
    %28 = vector.load %arg9[%c0_24, %c0_25, %c0_26] : memref<8x8x8xf32, #tpu.memory_space<vmem>>, vector<8x8x8xf32>
    tpu.vector_store %arg9[%c0_24, %c0_25, %c0_26], %27 {strides = array<i32>} : memref<8x8x8xf32, #tpu.memory_space<vmem>>, vector<8x8x8xf32>,
    %c0_27 = arith.constant 0 : index
    %c0_28 = arith.constant 0 : index
    %c0_29 = arith.constant 0 : index
    %29 = vector.load %arg7[%c0_27, %c0_28, %c0_29] : memref<8x8x1xf32, #tpu.memory_space<vmem>>, vector<8x8x1xf32>
    tpu.vector_store %arg7[%c0_27, %c0_28, %c0_29], %9 {strides = array<i32>} : memref<8x8x1xf32, #tpu.memory_space<vmem>>, vector<8x8x1xf32>,
    %c0_i32_30 = arith.constant 0 : i32
    %30 = arith.cmpi eq, %arg2, %c0_i32_30 : i32
    %31 = arith.extui %30 : i1 to i32
    %c0_i32_31 = arith.constant 0 : i32
    %32 = arith.cmpi ne, %31, %c0_i32_31 : i32
    scf.if %32 {
      %c0_32 = arith.constant 0 : index
      %c0_33 = arith.constant 0 : index
      %c0_34 = arith.constant 0 : index
      %33 = vector.load %arg9[%c0_32, %c0_33, %c0_34] : memref<8x8x8xf32, #tpu.memory_space<vmem>>, vector<8x8x8xf32>
      %c0_35 = arith.constant 0 : index
      %c0_36 = arith.constant 0 : index
      %c0_37 = arith.constant 0 : index
      %34 = vector.load %arg8[%c0_35, %c0_36, %c0_37] : memref<8x8x1xf32, #tpu.memory_space<vmem>>, vector<8x8x1xf32>
      %35 = tpu.reciprocal %34 {approx = true} : vector<8x8x1xf32> -> vector<8x8x1xf32>
      %36 = vector.broadcast %35 : vector<8x8x1xf32> to vector<8x8x8xf32>
      %37 = arith.mulf %33, %36 : vector<8x8x8xf32>
      %38 = arith.truncf %37 : vector<8x8x8xf32> to vector<8x8x8xbf16>
      %c0_38 = arith.constant 0 : index
      %c0_39 = arith.constant 0 : index
      %c0_40 = arith.constant 0 : index
      %39 = vector.load %arg6[%c0_38, %c0_39, %c0_40] : memref<8x8x8xbf16, #tpu.memory_space<vmem>>, vector<8x8x8xbf16>
      tpu.vector_store %arg6[%c0_38, %c0_39, %c0_40], %38 {strides = array<i32>} : memref<8x8x8xbf16, #tpu.memory_space<vmem>>, vector<8x8x8xbf16>,
    } else {
    }
    return
  }
  func.func @transform_0(%arg0: i32, %arg1: i32, %arg2: i32) -> (i32, i32, i32) {
    %c0_i32 = arith.constant 0 : i32
    %c0_i32_0 = arith.constant 0 : i32
    return %arg0, %arg1, %c0_i32 : i32, i32, i32
  }
  func.func @transform_1(%arg0: i32, %arg1: i32, %arg2: i32) -> (i32, i32, i32) {
    %c0_i32 = arith.constant 0 : i32
    %c0_i32_0 = arith.constant 0 : i32
    return %arg0, %arg2, %c0_i32 : i32, i32, i32
  }
  func.func @transform_2(%arg0: i32, %arg1: i32, %arg2: i32) -> (i32, i32, i32) {
    %c0_i32 = arith.constant 0 : i32
    %c0_i32_0 = arith.constant 0 : i32
    return %arg0, %arg2, %c0_i32 : i32, i32, i32
  }
  func.func @transform_3(%arg0: i32, %arg1: i32, %arg2: i32) -> (i32, i32, i32) {
    %c0_i32 = arith.constant 0 : i32
    %c0_i32_0 = arith.constant 0 : i32
    return %arg0, %arg1, %c0_i32 : i32, i32, i32
  }
}

module attributes {stable_mosaic.version = 11 : i64} {
  func.func @_linear_kernel(%arg0: i32, %arg1: i32, %arg2: i32, %arg3: memref<16x32xbf16, #tpu.memory_space<vmem>>, %arg4: memref<32x32xbf16, #tpu.memory_space<vmem>>, %arg5: memref<1x32xf32, #tpu.memory_space<vmem>>, %arg6: memref<16x32xf32, #tpu.memory_space<vmem>>, %arg7: memref<16x32xf32, #tpu.memory_space<vmem>>) attributes {dimension_semantics = [#tpu.dimension_semantics<parallel>, #tpu.dimension_semantics<parallel>, #tpu.dimension_semantics<arbitrary>], iteration_bounds = array<i64: 1, 1, 1>, scalar_prefetch = 0 : i64, scratch_operands = 1 : i64, tpu.core_type = #tpu.core_type<tc>, window_params = [{transform_indices = @transform_0, window_bounds = array<i64: 16, 32>}, {transform_indices = @transform_1, window_bounds = array<i64: 32, 32>}, {transform_indices = @transform_2, window_bounds = array<i64: 1, 32>}, {transform_indices = @transform_3, window_bounds = array<i64: 16, 32>}]} {
    %c0_i32 = arith.constant 0 : i32
    %0 = arith.cmpi eq, %arg2, %c0_i32 : i32
    %1 = arith.extui %0 : i1 to i32
    %c0_i32_0 = arith.constant 0 : i32
    %2 = arith.cmpi ne, %1, %c0_i32_0 : i32
    scf.if %2 {
      %cst_10 = arith.constant 0.000000e+00 : f32
      %12 = vector.broadcast %cst_10 : f32 to vector<16x32xf32>
      %c0_11 = arith.constant 0 : index
      %c0_12 = arith.constant 0 : index
      %13 = vector.load %arg7[%c0_11, %c0_12] : memref<16x32xf32, #tpu.memory_space<vmem>>, vector<16x32xf32>
      tpu.vector_store %arg7[%c0_11, %c0_12], %12 {strides = array<i32>} : memref<16x32xf32, #tpu.memory_space<vmem>>, vector<16x32xf32>,
    } else {
    }
    %c0 = arith.constant 0 : index
    %c0_1 = arith.constant 0 : index
    %3 = vector.load %arg7[%c0, %c0_1] : memref<16x32xf32, #tpu.memory_space<vmem>>, vector<16x32xf32>
    %c0_2 = arith.constant 0 : index
    %c0_3 = arith.constant 0 : index
    %4 = vector.load %arg3[%c0_2, %c0_3] : memref<16x32xbf16, #tpu.memory_space<vmem>>, vector<16x32xbf16>
    %c0_4 = arith.constant 0 : index
    %c0_5 = arith.constant 0 : index
    %5 = vector.load %arg4[%c0_4, %c0_5] : memref<32x32xbf16, #tpu.memory_space<vmem>>, vector<32x32xbf16>
    %cst = arith.constant dense<0.000000e+00> : vector<16x32xf32>
    %6 = tpu.matmul %4, %5, %cst {dimension_numbers = #tpu.dot_dimension_numbers<[1], [0], [0], [1], [0, 0, 1, 1], [], []>} : vector<16x32xbf16>, vector<32x32xbf16>, vector<16x32xf32> -> vector<16x32xf32>
    %7 = arith.addf %3, %6 : vector<16x32xf32>
    %c0_6 = arith.constant 0 : index
    %c0_7 = arith.constant 0 : index
    %8 = vector.load %arg7[%c0_6, %c0_7] : memref<16x32xf32, #tpu.memory_space<vmem>>, vector<16x32xf32>
    tpu.vector_store %arg7[%c0_6, %c0_7], %7 {strides = array<i32>} : memref<16x32xf32, #tpu.memory_space<vmem>>, vector<16x32xf32>,
    %c0_i32_8 = arith.constant 0 : i32
    %9 = arith.cmpi eq, %arg2, %c0_i32_8 : i32
    %10 = arith.extui %9 : i1 to i32
    %c0_i32_9 = arith.constant 0 : i32
    %11 = arith.cmpi ne, %10, %c0_i32_9 : i32
    scf.if %11 {
      %c0_10 = arith.constant 0 : index
      %c0_11 = arith.constant 0 : index
      %12 = vector.load %arg7[%c0_10, %c0_11] : memref<16x32xf32, #tpu.memory_space<vmem>>, vector<16x32xf32>
      %c0_12 = arith.constant 0 : index
      %c0_13 = arith.constant 0 : index
      %13 = vector.load %arg5[%c0_12, %c0_13] : memref<1x32xf32, #tpu.memory_space<vmem>>, vector<1x32xf32>
      %14 = vector.broadcast %13 : vector<1x32xf32> to vector<16x32xf32>
      %15 = arith.addf %12, %14 : vector<16x32xf32>
      %c0_14 = arith.constant 0 : index
      %c0_15 = arith.constant 0 : index
      %16 = vector.load %arg6[%c0_14, %c0_15] : memref<16x32xf32, #tpu.memory_space<vmem>>, vector<16x32xf32>
      tpu.vector_store %arg6[%c0_14, %c0_15], %15 {strides = array<i32>} : memref<16x32xf32, #tpu.memory_space<vmem>>, vector<16x32xf32>,
    } else {
    }
    return
  }
  func.func @transform_0(%arg0: i32, %arg1: i32, %arg2: i32) -> (i32, i32) {
    %c0_i32 = arith.constant 0 : i32
    return %arg0, %arg2 : i32, i32
  }
  func.func @transform_1(%arg0: i32, %arg1: i32, %arg2: i32) -> (i32, i32) {
    %c0_i32 = arith.constant 0 : i32
    return %arg2, %arg1 : i32, i32
  }
  func.func @transform_2(%arg0: i32, %arg1: i32, %arg2: i32) -> (i32, i32) {
    %c0_i32 = arith.constant 0 : i32
    %c0_i32_0 = arith.constant 0 : i32
    return %c0_i32, %arg1 : i32, i32
  }
  func.func @transform_3(%arg0: i32, %arg1: i32, %arg2: i32) -> (i32, i32) {
    %c0_i32 = arith.constant 0 : i32
    return %arg0, %arg1 : i32, i32
  }
}

</mosaic_0001>

<llo_original>
// kernel: self_attention_forward.3
$region0: #{self_attention_forward.3}
  #allocation0 [shape = 'u32[]', space=smem, size = 0x4, offset = 0x4, fixed_abs, tag = 'smem constant byte address 0x4 - core index']
  #allocation1 [shape = 'u32[144,128]{1,0:T(1,128)}', space=vmem, size = 0x12000, scoped, tag = 'internal scratch']
  #allocation2 [shape = 'f32[16,96]{1,0:T(8,128)}', space=vmem, size = 0x2000, scoped, tag = 'scratch operand']
  %s0 = inlined_call_operand.vmem [shape: bf16[16,32], index: 0, kind: input, shape index: {}]
  %s1 = inlined_call_operand.vmem [shape: bf16[32,96], index: 1, kind: input, shape index: {}]
  %s2 = inlined_call_operand.vmem [shape: f32[1,96], index: 2, kind: input, shape index: {}]
  %s3 = inlined_call_operand.vmem [shape: bf16[16,96], index: 3, kind: output, shape index: {}]
  %s4 = sld [smem:[#allocation0]]
  $region30: #{self_attention_forward.3} parent=0
    _
  %s6 = ssub.s32 1, %s4
  %s7 = scalar_select 0, %s6, %s4
  // Predicated region
  $region2: #{self_attention_forward.3} parent=0 // pred_check
    _
  $region3: #{self_attention_forward.3} parent=0 // pred_check_branch
    %9 = sbr.rel (0) target = $region5
  $region4: #{self_attention_forward.3} parent=0 // pred_region
    _
  $region5: #{self_attention_forward.3} parent=0 // pred_fallthru
    _
  // Predicated region
  $region6: #{self_attention_forward.3} parent=0 // pred_check
    _
  $region7: #{self_attention_forward.3} parent=0 // pred_check_branch
    %11 = sbr.rel (0) target = $region9
  $region8: #{self_attention_forward.3} parent=0 // pred_region
    _
  $region9: #{self_attention_forward.3} parent=0 // pred_fallthru
    _
  // Predicated region
  $region10: #{self_attention_forward.3} parent=0 // pred_check
    _
  $region11: #{self_attention_forward.3} parent=0 // pred_check_branch
    %13 = sbr.rel (0) target = $region13
  $region12: #{self_attention_forward.3} parent=0 // pred_region
    _
  $region13: #{self_attention_forward.3} parent=0 // pred_fallthru
    _
  %p15 = scmp.eq.s32.totalorder 0, 0
  // Predicated region
  $region14: #{self_attention_forward.3} parent=0 // pred_check
    %p16 = pneg %p15
  $region15: #{self_attention_forward.3} parent=0 // pred_check_branch
    %18 = sbr.rel (%p16) target = $region17
  $region16: #{self_attention_forward.3} parent=0 // pred_region
    %vm19 = vcmask 785408
    %20 = vst.msk [vmem:[#allocation2] sm:$0xff] %vm19, 0.0
    %21 = vst.msk [vmem:[#allocation2 + $0x8] sm:$0xff] %vm19, 0.0
  $region17: #{self_attention_forward.3} parent=0 // pred_fallthru
    _
  %v22 = vld [vmem:[#allocation2] sm:$0xff]
  %v23 = vld [vmem:[#allocation2 + $0x8] sm:$0xff]
  %v24 = vld [vmem:[%s0] sm:$0xf]
  %v25 = vld [vmem:[%s0 + $0x4] sm:$0xf]
  %v26 = vld [vmem:[%s1] sm:$0xf]
  %v27 = vld [vmem:[%s1 + $0x4] sm:$0xf]
  %v28 = vld [vmem:[%s1 + $0x8] sm:$0xf]
  %v29 = vld [vmem:[%s1 + $0xc] sm:$0xf]
  %v32 = vunpack.c.l.b16 %v24
  %v33 = vunpack.c.l.b16 %v25
  %v34 = vpack.c.b16 %v33, %v32
  %v39 = vunpack.c.l.b16 %v26
  %v40 = vunpack.c.l.b16 %v27
  %v41 = vunpack.c.l.b16 %v28
  %v42 = vunpack.c.l.b16 %v29
  %v43 = vpack.c.b16 %v40, %v39
  %v44 = vpack.c.b16 %v42, %v41
  %vm47 = vcmask 261120
  %v49 = vsel %vm47, %v34, 0
  %51 = vmatprep.subr.bf16.mxu0 0
  %52 = vmatpush1.bf16.msra.mxu0 %v43
  %53 = vmatprep.subr.bf16.mxu0 0
  %54 = vmatpush1.bf16.msra.mxu0 %v44
  %55 = vmatprep.subr.bf16.mxu0 0
  %56 = vmatpush1.bf16.msra.mxu0 0
  %57 = vmatprep.subr.bf16.mxu0 0
  %58 = vmatpush1.bf16.msra.mxu0 0
  %59 = vmatprep.subr.bf16.mxu0 0
  %60 = vmatpush1.bf16.msra.mxu0 0
  %61 = vmatprep.subr.bf16.mxu0 0
  %62 = vmatpush1.bf16.msra.mxu0 0
  %63 = vmatprep.subr.bf16.mxu0 0
  %64 = vmatpush1.bf16.msra.mxu0 0
  %65 = vmatprep.subr.bf16.mxu0 0
  %66 = vmatpush1.bf16.msra.mxu0 0
  %67 = vmatprep.subr.bf16.mxu0 0
  %68 = vmatpush1.bf16.msra.mxu0 0
  %69 = vmatprep.subr.bf16.mxu0 0
  %70 = vmatpush1.bf16.msra.mxu0 0
  %71 = vmatprep.subr.bf16.mxu0 0
  %72 = vmatpush1.bf16.msra.mxu0 0
  %73 = vmatprep.subr.bf16.mxu0 0
  %74 = vmatpush1.bf16.msra.mxu0 0
  %75 = vmatprep.subr.bf16.mxu0 0
  %76 = vmatpush1.bf16.msra.mxu0 0
  %77 = vmatprep.subr.bf16.mxu0 0
  %78 = vmatpush1.bf16.msra.mxu0 0
  %79 = vmatprep.subr.bf16.mxu0 0
  %80 = vmatpush1.bf16.msra.mxu0 0
  %81 = vmatprep.subr.bf16.mxu0 0
  %82 = vmatpush1.bf16.msra.mxu0 0
  %83 = vmatprep.mubr.bf16.mxu0 0
  %84 = vmatmul.mubr.bf16.gmra.mrb[0].mxu0 %v49
  %v85 = vpop.f32.mrb[0].mxu0
  %v86 = vadd.f32 0.0, %v85
  %v87 = vpop.f32.mrb[0].mxu0
  %v88 = vpop.f32.mrb[0].mxu0
  %v89 = vadd.f32 0.0, %v88
  %v90 = vpop.f32.mrb[0].mxu0
  %91 = vdwg.mxu0
  %v92 = vadd.f32 %v22, %v86
  %v93 = vadd.f32 %v23, %v89
  %vm94 = vcmask 785408
  %95 = vst.msk [vmem:[#allocation2] sm:$0xff] %vm94, %v92
  %96 = vst.msk [vmem:[#allocation2 + $0x8] sm:$0xff] %vm94, %v93
  // Predicated region
  $region18: #{self_attention_forward.3} parent=0 // pred_check
    %p97 = pneg %p15
  $region19: #{self_attention_forward.3} parent=0 // pred_check_branch
    %99 = sbr.rel (%p97) target = $region21
  $region20: #{self_attention_forward.3} parent=0 // pred_region
    %v100 = vld [vmem:[#allocation2] sm:$0xff]
    %v101 = vld [vmem:[#allocation2 + $0x8] sm:$0xff]
    %v102 = vld [vmem:[%s2] sm:$0x1]
    %v104 = vlaneseq
    %v105 = vshrl.u32 %v104, 7
    %v106 = vsub.s32 0, %v105
    %v107 = vrot.slane %v102, %v106
    %v109 = vadd.f32 %v100, %v107
    %v110 = vadd.f32 %v101, %v107
    %v111 = vpack.c.bf16 %v110, %v109
    %v113 = vunpack.c.l.b16 %v111
    %v114 = vunpack.c.h.b16 %v111
    %v115 = vpack.c.b16 %v113, %v113
    %v116 = vpack.c.b16 %v114, %v114
    %vm119 = vcmask 781312
    %120 = vst.msk [vmem:[%s3] sm:$0xf] %vm119, %v115
    %121 = vst.msk [vmem:[%s3 + $0x4] sm:$0xf] %vm119, %v116
  $region21: #{self_attention_forward.3} parent=0 // pred_fallthru
    _
  // Predicated region
  $region22: #{self_attention_forward.3} parent=0 // pred_check
    _
  $region23: #{self_attention_forward.3} parent=0 // pred_check_branch
    %123 = sbr.rel (0) target = $region25
  $region24: #{self_attention_forward.3} parent=0 // pred_region
    _
  $region25: #{self_attention_forward.3} parent=0 // pred_fallthru
    _
  // Predicated region
  $region26: #{self_attention_forward.3} parent=0 // pred_check
    _
  $region27: #{self_attention_forward.3} parent=0 // pred_check_branch
    %125 = sbr.rel (0) target = $region29
  $region28: #{self_attention_forward.3} parent=0 // pred_region
    _
  $region29: #{self_attention_forward.3} parent=0 // pred_fallthru
    _

// kernel: self_attention_forward.5
$region0: #{self_attention_forward.5}
  #allocation0 [shape = 'u32[]', space=smem, size = 0x4, offset = 0x4, fixed_abs, tag = 'smem constant byte address 0x4 - core index']
  #allocation1 [shape = 'u32[144,128]{1,0:T(1,128)}', space=vmem, size = 0x12000, scoped, tag = 'internal scratch']
  #allocation2 [shape = 'f32[16,32]{1,0:T(8,128)}', space=vmem, size = 0x2000, scoped, tag = 'scratch operand']
  %s0 = inlined_call_operand.vmem [shape: bf16[16,32], index: 0, kind: input, shape index: {}]
  %s1 = inlined_call_operand.vmem [shape: bf16[32,32], index: 1, kind: input, shape index: {}]
  %s2 = inlined_call_operand.vmem [shape: f32[1,32], index: 2, kind: input, shape index: {}]
  %s3 = inlined_call_operand.hbm [shape: f32[16,32], index: 3, kind: output, shape index: {}]
  %s4 = sld [smem:[#allocation0]]
  $region30: #{self_attention_forward.5} parent=0
    _
  %s6 = ssub.s32 1, %s4
  %s7 = scalar_select 0, %s6, %s4
  $region1: #{self_attention_forward.5} parent=0
    #allocation3 [shape = 'u8[8192]{0}', space=vmem, size = 0x2000, scoped, tag = 'output window, operand 0, single buffered']
    #allocation4 [shape = 's32[1]{0}', space=sflag, size = 0x4, scoped, tag = 'scoped memory for self_attention_forward.5']
    %8 = vsyncpa [#allocation4], 0
    // Predicated region
    $region2: #{self_attention_forward.5} parent=1 // pred_check
      _
    $region3: #{self_attention_forward.5} parent=1 // pred_check_branch
      %10 = sbr.rel (0) target = $region5
    $region4: #{self_attention_forward.5} parent=1 // pred_region
      _
    $region5: #{self_attention_forward.5} parent=1 // pred_fallthru
      _
    // Predicated region
    $region6: #{self_attention_forward.5} parent=1 // pred_check
      _
    $region7: #{self_attention_forward.5} parent=1 // pred_check_branch
      %12 = sbr.rel (0) target = $region9
    $region8: #{self_attention_forward.5} parent=1 // pred_region
      _
    $region9: #{self_attention_forward.5} parent=1 // pred_fallthru
      _
    // Predicated region
    $region10: #{self_attention_forward.5} parent=1 // pred_check
      _
    $region11: #{self_attention_forward.5} parent=1 // pred_check_branch
      %14 = sbr.rel (0) target = $region13
    $region12: #{self_attention_forward.5} parent=1 // pred_region
      _
    $region13: #{self_attention_forward.5} parent=1 // pred_fallthru
      _
    %p16 = scmp.eq.s32.totalorder 0, 0
    // Predicated region
    $region14: #{self_attention_forward.5} parent=1 // pred_check
      %p17 = pneg %p16
    $region15: #{self_attention_forward.5} parent=1 // pred_check_branch
      %19 = sbr.rel (%p17) target = $region17
    $region16: #{self_attention_forward.5} parent=1 // pred_region
      %vm20 = vcmask 261120
      %21 = vst.msk [vmem:[#allocation2] sm:$0xff] %vm20, 0.0
      %22 = vst.msk [vmem:[#allocation2 + $0x8] sm:$0xff] %vm20, 0.0
    $region17: #{self_attention_forward.5} parent=1 // pred_fallthru
      _
    %v23 = vld [vmem:[#allocation2] sm:$0xff]
    %v24 = vld [vmem:[#allocation2 + $0x8] sm:$0xff]
    %v25 = vld [vmem:[%s0] sm:$0xf]
    %v26 = vld [vmem:[%s0 + $0x4] sm:$0xf]
    %v27 = vld [vmem:[%s1] sm:$0xf]
    %v28 = vld [vmem:[%s1 + $0x4] sm:$0xf]
    %v29 = vld [vmem:[%s1 + $0x8] sm:$0xf]
    %v30 = vld [vmem:[%s1 + $0xc] sm:$0xf]
    %v33 = vunpack.c.l.b16 %v25
    %v34 = vunpack.c.l.b16 %v26
    %v35 = vpack.c.b16 %v34, %v33
    %v40 = vunpack.c.l.b16 %v27
    %v41 = vunpack.c.l.b16 %v28
    %v42 = vunpack.c.l.b16 %v29
    %v43 = vunpack.c.l.b16 %v30
    %v44 = vpack.c.b16 %v41, %v40
    %v45 = vpack.c.b16 %v43, %v42
    %vm48 = vcmask 261120
    %v50 = vsel %vm48, %v35, 0
    %52 = vmatprep.subr.bf16.mxu0 0
    %53 = vmatpush1.bf16.msra.mxu0 %v44
    %54 = vmatprep.subr.bf16.mxu0 0
    %55 = vmatpush1.bf16.msra.mxu0 %v45
    %56 = vmatprep.subr.bf16.mxu0 0
    %57 = vmatpush1.bf16.msra.mxu0 0
    %58 = vmatprep.subr.bf16.mxu0 0
    %59 = vmatpush1.bf16.msra.mxu0 0
    %60 = vmatprep.subr.bf16.mxu0 0
    %61 = vmatpush1.bf16.msra.mxu0 0
    %62 = vmatprep.subr.bf16.mxu0 0
    %63 = vmatpush1.bf16.msra.mxu0 0
    %64 = vmatprep.subr.bf16.mxu0 0
    %65 = vmatpush1.bf16.msra.mxu0 0
    %66 = vmatprep.subr.bf16.mxu0 0
    %67 = vmatpush1.bf16.msra.mxu0 0
    %68 = vmatprep.subr.bf16.mxu0 0
    %69 = vmatpush1.bf16.msra.mxu0 0
    %70 = vmatprep.subr.bf16.mxu0 0
    %71 = vmatpush1.bf16.msra.mxu0 0
    %72 = vmatprep.subr.bf16.mxu0 0
    %73 = vmatpush1.bf16.msra.mxu0 0
    %74 = vmatprep.subr.bf16.mxu0 0
    %75 = vmatpush1.bf16.msra.mxu0 0
    %76 = vmatprep.subr.bf16.mxu0 0
    %77 = vmatpush1.bf16.msra.mxu0 0
    %78 = vmatprep.subr.bf16.mxu0 0
    %79 = vmatpush1.bf16.msra.mxu0 0
    %80 = vmatprep.subr.bf16.mxu0 0
    %81 = vmatpush1.bf16.msra.mxu0 0
    %82 = vmatprep.subr.bf16.mxu0 0
    %83 = vmatpush1.bf16.msra.mxu0 0
    %84 = vmatprep.mubr.bf16.mxu0 0
    %85 = vmatmul.mubr.bf16.gmra.mrb[0].mxu0 %v50
    %v86 = vpop.f32.mrb[0].mxu0
    %v87 = vadd.f32 0.0, %v86
    %v88 = vpop.f32.mrb[0].mxu0
    %v89 = vpop.f32.mrb[0].mxu0
    %v90 = vadd.f32 0.0, %v89
    %v91 = vpop.f32.mrb[0].mxu0
    %92 = vdwg.mxu0
    %v93 = vadd.f32 %v23, %v87
    %v94 = vadd.f32 %v24, %v90
    %95 = vst.msk [vmem:[#allocation2] sm:$0xff] %vm48, %v93
    %96 = vst.msk [vmem:[#allocation2 + $0x8] sm:$0xff] %vm48, %v94
    // Predicated region
    $region18: #{self_attention_forward.5} parent=1 // pred_check
      %p97 = pneg %p16
    $region19: #{self_attention_forward.5} parent=1 // pred_check_branch
      %99 = sbr.rel (%p97) target = $region21
    $region20: #{self_attention_forward.5} parent=1 // pred_region
      %v100 = vld [vmem:[#allocation2] sm:$0xff]
      %v101 = vld [vmem:[#allocation2 + $0x8] sm:$0xff]
      %v102 = vld [vmem:[%s2] sm:$0x1]
      %v104 = vlaneseq
      %v105 = vshrl.u32 %v104, 7
      %v106 = vsub.s32 0, %v105
      %v107 = vrot.slane %v102, %v106
      %v109 = vadd.f32 %v100, %v107
      %v110 = vadd.f32 %v101, %v107
      %111 = vst.msk [vmem:[#allocation3] sm:$0xff] %vm48, %v109
      %112 = vst.msk [vmem:[#allocation3 + $0x8] sm:$0xff] %vm48, %v110
    $region21: #{self_attention_forward.5} parent=1 // pred_fallthru
      _
    // Predicated region
    $region22: #{self_attention_forward.5} parent=1 // pred_check
      _
    $region23: #{self_attention_forward.5} parent=1 // pred_check_branch
      %114 = sbr.rel (0) target = $region25
    $region24: #{self_attention_forward.5} parent=1 // pred_region
      %s116 = ssub.s32 256, 256
      %117 = vsyncadd [#allocation4], %s116
      %s118 = sshll.u32 [#allocation3], 4
      %s119 = int_to_ptr.vmem [resolvable:$true] %s118
      %124 = dma.vmem_to_hbm [thread:$0]  %s119, 256, %s3, [#allocation4], 128, 128, 8
    $region25: #{self_attention_forward.5} parent=1 // pred_fallthru
      _
    // Predicated region
    $region26: #{self_attention_forward.5} parent=1 // pred_check
      _
    $region27: #{self_attention_forward.5} parent=1 // pred_check_branch
      %126 = sbr.rel (0) target = $region29
    $region28: #{self_attention_forward.5} parent=1 // pred_region
      %127 = dma.done [#allocation4], 256
    $region29: #{self_attention_forward.5} parent=1 // pred_fallthru
      _
    %128 = vsyncpa [#allocation4], 1

// kernel: self_attention_forward.4
$region0: #{self_attention_forward.4}
  #allocation0 [shape = 'u32[]', space=smem, size = 0x4, offset = 0x4, fixed_abs, tag = 'smem constant byte address 0x4 - core index']
  #allocation1 [shape = 'u32[144,128]{1,0:T(1,128)}', space=vmem, size = 0x12000, scoped, tag = 'internal scratch']
  #allocation2 [shape = 'f32[8,8,1]{2,1,0:T(8,128)}', space=vmem, size = 0x8000, scoped, tag = 'scratch operand']
  #allocation3 [shape = 'f32[8,8,1]{2,1,0:T(8,128)}', space=vmem, size = 0x8000, scoped, tag = 'scratch operand']
  #allocation4 [shape = 'f32[8,8,8]{2,1,0:T(8,128)}', space=vmem, size = 0x8000, scoped, tag = 'scratch operand']
  %s0 = inlined_call_operand.vmem [shape: bf16[8,8,8], index: 0, kind: input, shape index: {}]
  %s1 = inlined_call_operand.vmem [shape: bf16[8,8,8], index: 1, kind: input, shape index: {}]
  %s2 = inlined_call_operand.vmem [shape: bf16[8,8,8], index: 2, kind: input, shape index: {}]
  %s3 = inlined_call_operand.vmem [shape: bf16[8,8,8], index: 3, kind: output, shape index: {}]
  %s4 = sld [smem:[#allocation0]]
  $region30: #{self_attention_forward.4} parent=0
    _
  %s6 = ssub.s32 1, %s4
  %s7 = scalar_select 0, %s6, %s4
  // Predicated region
  $region2: #{self_attention_forward.4} parent=0 // pred_check
    _
  $region3: #{self_attention_forward.4} parent=0 // pred_check_branch
    %9 = sbr.rel (0) target = $region5
  $region4: #{self_attention_forward.4} parent=0 // pred_region
    _
  $region5: #{self_attention_forward.4} parent=0 // pred_fallthru
    _
  // Predicated region
  $region6: #{self_attention_forward.4} parent=0 // pred_check
    _
  $region7: #{self_attention_forward.4} parent=0 // pred_check_branch
    %11 = sbr.rel (0) target = $region9
  $region8: #{self_attention_forward.4} parent=0 // pred_region
    _
  $region9: #{self_attention_forward.4} parent=0 // pred_fallthru
    _
  // Predicated region
  $region10: #{self_attention_forward.4} parent=0 // pred_check
    _
  $region11: #{self_attention_forward.4} parent=0 // pred_check_branch
    %13 = sbr.rel (0) target = $region13
  $region12: #{self_attention_forward.4} parent=0 // pred_region
    _
  $region13: #{self_attention_forward.4} parent=0 // pred_fallthru
    _
  %p15 = scmp.eq.s32.totalorder 0, 0
  // Predicated region
  $region14: #{self_attention_forward.4} parent=0 // pred_check
    %p16 = pneg %p15
  $region15: #{self_attention_forward.4} parent=0 // pred_check_branch
    %18 = sbr.rel (%p16) target = $region17
  $region16: #{self_attention_forward.4} parent=0 // pred_region
    %vm19 = vcmask 7168
    %20 = vst.msk [vmem:[#allocation2] sm:$0xff] %vm19, -1e+30
    %21 = vst.msk [vmem:[#allocation2 + $0x8] sm:$0xff] %vm19, -1e+30
    %22 = vst.msk [vmem:[#allocation2 + $0x10] sm:$0xff] %vm19, -1e+30
    %23 = vst.msk [vmem:[#allocation2 + $0x18] sm:$0xff] %vm19, -1e+30
    %24 = vst.msk [vmem:[#allocation2 + $0x20] sm:$0xff] %vm19, -1e+30
    %25 = vst.msk [vmem:[#allocation2 + $0x28] sm:$0xff] %vm19, -1e+30
    %26 = vst.msk [vmem:[#allocation2 + $0x30] sm:$0xff] %vm19, -1e+30
    %27 = vst.msk [vmem:[#allocation2 + $0x38] sm:$0xff] %vm19, -1e+30
    %28 = vst.msk [vmem:[#allocation3] sm:$0xff] %vm19, 0.0
    %29 = vst.msk [vmem:[#allocation3 + $0x8] sm:$0xff] %vm19, 0.0
    %30 = vst.msk [vmem:[#allocation3 + $0x10] sm:$0xff] %vm19, 0.0
    %31 = vst.msk [vmem:[#allocation3 + $0x18] sm:$0xff] %vm19, 0.0
    %32 = vst.msk [vmem:[#allocation3 + $0x20] sm:$0xff] %vm19, 0.0
    %33 = vst.msk [vmem:[#allocation3 + $0x28] sm:$0xff] %vm19, 0.0
    %34 = vst.msk [vmem:[#allocation3 + $0x30] sm:$0xff] %vm19, 0.0
    %35 = vst.msk [vmem:[#allocation3 + $0x38] sm:$0xff] %vm19, 0.0
    %vm36 = vcmask 64512
    %37 = vst.msk [vmem:[#allocation4] sm:$0xff] %vm36, 0.0
    %38 = vst.msk [vmem:[#allocation4 + $0x8] sm:$0xff] %vm36, 0.0
    %39 = vst.msk [vmem:[#allocation4 + $0x10] sm:$0xff] %vm36, 0.0
    %40 = vst.msk [vmem:[#allocation4 + $0x18] sm:$0xff] %vm36, 0.0
    %41 = vst.msk [vmem:[#allocation4 + $0x20] sm:$0xff] %vm36, 0.0
    %42 = vst.msk [vmem:[#allocation4 + $0x28] sm:$0xff] %vm36, 0.0
    %43 = vst.msk [vmem:[#allocation4 + $0x30] sm:$0xff] %vm36, 0.0
    %44 = vst.msk [vmem:[#allocation4 + $0x38] sm:$0xff] %vm36, 0.0
  $region17: #{self_attention_forward.4} parent=0 // pred_fallthru
    _
  %v45 = vld [vmem:[%s0] sm:$0xf]
  %v46 = vld [vmem:[%s0 + $0x4] sm:$0xf]
  %v47 = vld [vmem:[%s0 + $0x8] sm:$0xf]
  %v48 = vld [vmem:[%s0 + $0xc] sm:$0xf]
  %v49 = vld [vmem:[%s0 + $0x10] sm:$0xf]
  %v50 = vld [vmem:[%s0 + $0x14] sm:$0xf]
  %v51 = vld [vmem:[%s0 + $0x18] sm:$0xf]
  %v52 = vld [vmem:[%s0 + $0x1c] sm:$0xf]
  %v53 = vld [vmem:[%s1] sm:$0xf]
  %v54 = vld [vmem:[%s1 + $0x4] sm:$0xf]
  %v55 = vld [vmem:[%s1 + $0x8] sm:$0xf]
  %v56 = vld [vmem:[%s1 + $0xc] sm:$0xf]
  %v57 = vld [vmem:[%s1 + $0x10] sm:$0xf]
  %v58 = vld [vmem:[%s1 + $0x14] sm:$0xf]
  %v59 = vld [vmem:[%s1 + $0x18] sm:$0xf]
  %v60 = vld [vmem:[%s1 + $0x1c] sm:$0xf]
  %vm61 = vcmask 64512
  %v63 = vsel %vm61, %v45, 0
  %v66 = vsel %vm61, %v53, 0
  %68 = vmatprep.subr.bf16.mxu0 0
  %69 = vmatpush1.bf16.xpose.msra.mxu0 %v66
  %70 = vmatprep.subr.bf16.mxu0 0
  %71 = vmatpush1.bf16.xpose.msra.mxu0 0
  %72 = vmatprep.subr.bf16.mxu0 0
  %73 = vmatpush1.bf16.xpose.msra.mxu0 0
  %74 = vmatprep.subr.bf16.mxu0 0
  %75 = vmatpush1.bf16.xpose.msra.mxu0 0
  %76 = vmatprep.subr.bf16.mxu0 0
  %77 = vmatpush1.bf16.xpose.msra.mxu0 0
  %78 = vmatprep.subr.bf16.mxu0 0
  %79 = vmatpush1.bf16.xpose.msra.mxu0 0
  %80 = vmatprep.subr.bf16.mxu0 0
  %81 = vmatpush1.bf16.xpose.msra.mxu0 0
  %82 = vmatprep.subr.bf16.mxu0 0
  %83 = vmatpush1.bf16.xpose.msra.mxu0 0
  %84 = vmatprep.subr.bf16.mxu0 0
  %85 = vmatpush1.bf16.xpose.msra.mxu0 0
  %86 = vmatprep.subr.bf16.mxu0 0
  %87 = vmatpush1.bf16.xpose.msra.mxu0 0
  %88 = vmatprep.subr.bf16.mxu0 0
  %89 = vmatpush1.bf16.xpose.msra.mxu0 0
  %90 = vmatprep.subr.bf16.mxu0 0
  %91 = vmatpush1.bf16.xpose.msra.mxu0 0
  %92 = vmatprep.subr.bf16.mxu0 0
  %93 = vmatpush1.bf16.xpose.msra.mxu0 0
  %94 = vmatprep.subr.bf16.mxu0 0
  %95 = vmatpush1.bf16.xpose.msra.mxu0 0
  %96 = vmatprep.subr.bf16.mxu0 0
  %97 = vmatpush1.bf16.xpose.msra.mxu0 0
  %98 = vmatprep.subr.bf16.mxu0 0
  %99 = vmatpush1.bf16.xpose.msra.mxu0 0
  %100 = vmatprep.mubr.bf16.mxu0 0
  %101 = vmatmul.mubr.bf16.gmra.mrb[0].mxu0 %v63
  %v102 = vpop.f32.mrb[0].mxu0
  %v103 = vadd.f32 0.0, %v102
  %v104 = vpop.f32.mrb[0].mxu0
  %v105 = vpop.f32.mrb[0].mxu0
  %v106 = vpop.f32.mrb[0].mxu0
  %107 = vdwg.mxu0
  %v109 = vsel %vm61, %v46, 0
  %v112 = vsel %vm61, %v54, 0
  %114 = vmatprep.subr.bf16.mxu0 0
  %115 = vmatpush1.bf16.xpose.msra.mxu0 %v112
  %116 = vmatprep.subr.bf16.mxu0 0
  %117 = vmatpush1.bf16.xpose.msra.mxu0 0
  %118 = vmatprep.subr.bf16.mxu0 0
  %119 = vmatpush1.bf16.xpose.msra.mxu0 0
  %120 = vmatprep.subr.bf16.mxu0 0
  %121 = vmatpush1.bf16.xpose.msra.mxu0 0
  %122 = vmatprep.subr.bf16.mxu0 0
  %123 = vmatpush1.bf16.xpose.msra.mxu0 0
  %124 = vmatprep.subr.bf16.mxu0 0
  %125 = vmatpush1.bf16.xpose.msra.mxu0 0
  %126 = vmatprep.subr.bf16.mxu0 0
  %127 = vmatpush1.bf16.xpose.msra.mxu0 0
  %128 = vmatprep.subr.bf16.mxu0 0
  %129 = vmatpush1.bf16.xpose.msra.mxu0 0
  %130 = vmatprep.subr.bf16.mxu0 0
  %131 = vmatpush1.bf16.xpose.msra.mxu0 0
  %132 = vmatprep.subr.bf16.mxu0 0
  %133 = vmatpush1.bf16.xpose.msra.mxu0 0
  %134 = vmatprep.subr.bf16.mxu0 0
  %135 = vmatpush1.bf16.xpose.msra.mxu0 0
  %136 = vmatprep.subr.bf16.mxu0 0
  %137 = vmatpush1.bf16.xpose.msra.mxu0 0
  %138 = vmatprep.subr.bf16.mxu0 0
  %139 = vmatpush1.bf16.xpose.msra.mxu0 0
  %140 = vmatprep.subr.bf16.mxu0 0
  %141 = vmatpush1.bf16.xpose.msra.mxu0 0
  %142 = vmatprep.subr.bf16.mxu0 0
  %143 = vmatpush1.bf16.xpose.msra.mxu0 0
  %144 = vmatprep.subr.bf16.mxu0 0
  %145 = vmatpush1.bf16.xpose.msra.mxu0 0
  %146 = vmatprep.mubr.bf16.mxu0 0
  %147 = vmatmul.mubr.bf16.gmra.mrb[0].mxu0 %v109
  %v148 = vpop.f32.mrb[0].mxu0
  %v149 = vadd.f32 0.0, %v148
  %v150 = vpop.f32.mrb[0].mxu0
  %v151 = vpop.f32.mrb[0].mxu0
  %v152 = vpop.f32.mrb[0].mxu0
  %153 = vdwg.mxu0
  %v155 = vsel %vm61, %v47, 0
  %v158 = vsel %vm61, %v55, 0
  %160 = vmatprep.subr.bf16.mxu0 0
  %161 = vmatpush1.bf16.xpose.msra.mxu0 %v158
  %162 = vmatprep.subr.bf16.mxu0 0
  %163 = vmatpush1.bf16.xpose.msra.mxu0 0
  %164 = vmatprep.subr.bf16.mxu0 0
  %165 = vmatpush1.bf16.xpose.msra.mxu0 0
  %166 = vmatprep.subr.bf16.mxu0 0
  %167 = vmatpush1.bf16.xpose.msra.mxu0 0
  %168 = vmatprep.subr.bf16.mxu0 0
  %169 = vmatpush1.bf16.xpose.msra.mxu0 0
  %170 = vmatprep.subr.bf16.mxu0 0
  %171 = vmatpush1.bf16.xpose.msra.mxu0 0
  %172 = vmatprep.subr.bf16.mxu0 0
  %173 = vmatpush1.bf16.xpose.msra.mxu0 0
  %174 = vmatprep.subr.bf16.mxu0 0
  %175 = vmatpush1.bf16.xpose.msra.mxu0 0
  %176 = vmatprep.subr.bf16.mxu0 0
  %177 = vmatpush1.bf16.xpose.msra.mxu0 0
  %178 = vmatprep.subr.bf16.mxu0 0
  %179 = vmatpush1.bf16.xpose.msra.mxu0 0
  %180 = vmatprep.subr.bf16.mxu0 0
  %181 = vmatpush1.bf16.xpose.msra.mxu0 0
  %182 = vmatprep.subr.bf16.mxu0 0
  %183 = vmatpush1.bf16.xpose.msra.mxu0 0
  %184 = vmatprep.subr.bf16.mxu0 0
  %185 = vmatpush1.bf16.xpose.msra.mxu0 0
  %186 = vmatprep.subr.bf16.mxu0 0
  %187 = vmatpush1.bf16.xpose.msra.mxu0 0
  %188 = vmatprep.subr.bf16.mxu0 0
  %189 = vmatpush1.bf16.xpose.msra.mxu0 0
  %190 = vmatprep.subr.bf16.mxu0 0
  %191 = vmatpush1.bf16.xpose.msra.mxu0 0
  %192 = vmatprep.mubr.bf16.mxu0 0
  %193 = vmatmul.mubr.bf16.gmra.mrb[0].mxu0 %v155
  %v194 = vpop.f32.mrb[0].mxu0
  %v195 = vadd.f32 0.0, %v194
  %v196 = vpop.f32.mrb[0].mxu0
  %v197 = vpop.f32.mrb[0].mxu0
  %v198 = vpop.f32.mrb[0].mxu0
  %199 = vdwg.mxu0
  %v201 = vsel %vm61, %v48, 0
  %v204 = vsel %vm61, %v56, 0
  %206 = vmatprep.subr.bf16.mxu0 0
  %207 = vmatpush1.bf16.xpose.msra.mxu0 %v204
  %208 = vmatprep.subr.bf16.mxu0 0
  %209 = vmatpush1.bf16.xpose.msra.mxu0 0
  %210 = vmatprep.subr.bf16.mxu0 0
  %211 = vmatpush1.bf16.xpose.msra.mxu0 0
  %212 = vmatprep.subr.bf16.mxu0 0
  %213 = vmatpush1.bf16.xpose.msra.mxu0 0
  %214 = vmatprep.subr.bf16.mxu0 0
  %215 = vmatpush1.bf16.xpose.msra.mxu0 0
  %216 = vmatprep.subr.bf16.mxu0 0
  %217 = vmatpush1.bf16.xpose.msra.mxu0 0
  %218 = vmatprep.subr.bf16.mxu0 0
  %219 = vmatpush1.bf16.xpose.msra.mxu0 0
  %220 = vmatprep.subr.bf16.mxu0 0
  %221 = vmatpush1.bf16.xpose.msra.mxu0 0
  %222 = vmatprep.subr.bf16.mxu0 0
  %223 = vmatpush1.bf16.xpose.msra.mxu0 0
  %224 = vmatprep.subr.bf16.mxu0 0
  %225 = vmatpush1.bf16.xpose.msra.mxu0 0
  %226 = vmatprep.subr.bf16.mxu0 0
  %227 = vmatpush1.bf16.xpose.msra.mxu0 0
  %228 = vmatprep.subr.bf16.mxu0 0
  %229 = vmatpush1.bf16.xpose.msra.mxu0 0
  %230 = vmatprep.subr.bf16.mxu0 0
  %231 = vmatpush1.bf16.xpose.msra.mxu0 0
  %232 = vmatprep.subr.bf16.mxu0 0
  %233 = vmatpush1.bf16.xpose.msra.mxu0 0
  %234 = vmatprep.subr.bf16.mxu0 0
  %235 = vmatpush1.bf16.xpose.msra.mxu0 0
  %236 = vmatprep.subr.bf16.mxu0 0
  %237 = vmatpush1.bf16.xpose.msra.mxu0 0
  %238 = vmatprep.mubr.bf16.mxu0 0
  %239 = vmatmul.mubr.bf16.gmra.mrb[0].mxu0 %v201
  %v240 = vpop.f32.mrb[0].mxu0
  %v241 = vadd.f32 0.0, %v240
  %v242 = vpop.f32.mrb[0].mxu0
  %v243 = vpop.f32.mrb[0].mxu0
  %v244 = vpop.f32.mrb[0].mxu0
  %245 = vdwg.mxu0
  %v247 = vsel %vm61, %v49, 0
  %v250 = vsel %vm61, %v57, 0
  %252 = vmatprep.subr.bf16.mxu0 0
  %253 = vmatpush1.bf16.xpose.msra.mxu0 %v250
  %254 = vmatprep.subr.bf16.mxu0 0
  %255 = vmatpush1.bf16.xpose.msra.mxu0 0
  %256 = vmatprep.subr.bf16.mxu0 0
  %257 = vmatpush1.bf16.xpose.msra.mxu0 0
  %258 = vmatprep.subr.bf16.mxu0 0
  %259 = vmatpush1.bf16.xpose.msra.mxu0 0
  %260 = vmatprep.subr.bf16.mxu0 0
  %261 = vmatpush1.bf16.xpose.msra.mxu0 0
  %262 = vmatprep.subr.bf16.mxu0 0
  %263 = vmatpush1.bf16.xpose.msra.mxu0 0
  %264 = vmatprep.subr.bf16.mxu0 0
  %265 = vmatpush1.bf16.xpose.msra.mxu0 0
  %266 = vmatprep.subr.bf16.mxu0 0
  %267 = vmatpush1.bf16.xpose.msra.mxu0 0
  %268 = vmatprep.subr.bf16.mxu0 0
  %269 = vmatpush1.bf16.xpose.msra.mxu0 0
  %270 = vmatprep.subr.bf16.mxu0 0
  %271 = vmatpush1.bf16.xpose.msra.mxu0 0
  %272 = vmatprep.subr.bf16.mxu0 0
  %273 = vmatpush1.bf16.xpose.msra.mxu0 0
  %274 = vmatprep.subr.bf16.mxu0 0
  %275 = vmatpush1.bf16.xpose.msra.mxu0 0
  %276 = vmatprep.subr.bf16.mxu0 0
  %277 = vmatpush1.bf16.xpose.msra.mxu0 0
  %278 = vmatprep.subr.bf16.mxu0 0
  %279 = vmatpush1.bf16.xpose.msra.mxu0 0
  %280 = vmatprep.subr.bf16.mxu0 0
  %281 = vmatpush1.bf16.xpose.msra.mxu0 0
  %282 = vmatprep.subr.bf16.mxu0 0
  %283 = vmatpush1.bf16.xpose.msra.mxu0 0
  %284 = vmatprep.mubr.bf16.mxu0 0
  %285 = vmatmul.mubr.bf16.gmra.mrb[0].mxu0 %v247
  %v286 = vpop.f32.mrb[0].mxu0
  %v287 = vadd.f32 0.0, %v286
  %v288 = vpop.f32.mrb[0].mxu0
  %v289 = vpop.f32.mrb[0].mxu0
  %v290 = vpop.f32.mrb[0].mxu0
  %291 = vdwg.mxu0
  %v293 = vsel %vm61, %v50, 0
  %v296 = vsel %vm61, %v58, 0
  %298 = vmatprep.subr.bf16.mxu0 0
  %299 = vmatpush1.bf16.xpose.msra.mxu0 %v296
  %300 = vmatprep.subr.bf16.mxu0 0
  %301 = vmatpush1.bf16.xpose.msra.mxu0 0
  %302 = vmatprep.subr.bf16.mxu0 0
  %303 = vmatpush1.bf16.xpose.msra.mxu0 0
  %304 = vmatprep.subr.bf16.mxu0 0
  %305 = vmatpush1.bf16.xpose.msra.mxu0 0
  %306 = vmatprep.subr.bf16.mxu0 0
  %307 = vmatpush1.bf16.xpose.msra.mxu0 0
  %308 = vmatprep.subr.bf16.mxu0 0
  %309 = vmatpush1.bf16.xpose.msra.mxu0 0
  %310 = vmatprep.subr.bf16.mxu0 0
  %311 = vmatpush1.bf16.xpose.msra.mxu0 0
  %312 = vmatprep.subr.bf16.mxu0 0
  %313 = vmatpush1.bf16.xpose.msra.mxu0 0
  %314 = vmatprep.subr.bf16.mxu0 0
  %315 = vmatpush1.bf16.xpose.msra.mxu0 0
  %316 = vmatprep.subr.bf16.mxu0 0
  %317 = vmatpush1.bf16.xpose.msra.mxu0 0
  %318 = vmatprep.subr.bf16.mxu0 0
  %319 = vmatpush1.bf16.xpose.msra.mxu0 0
  %320 = vmatprep.subr.bf16.mxu0 0
  %321 = vmatpush1.bf16.xpose.msra.mxu0 0
  %322 = vmatprep.subr.bf16.mxu0 0
  %323 = vmatpush1.bf16.xpose.msra.mxu0 0
  %324 = vmatprep.subr.bf16.mxu0 0
  %325 = vmatpush1.bf16.xpose.msra.mxu0 0
  %326 = vmatprep.subr.bf16.mxu0 0
  %327 = vmatpush1.bf16.xpose.msra.mxu0 0
  %328 = vmatprep.subr.bf16.mxu0 0
  %329 = vmatpush1.bf16.xpose.msra.mxu0 0
  %330 = vmatprep.mubr.bf16.mxu0 0
  %331 = vmatmul.mubr.bf16.gmra.mrb[0].mxu0 %v293
  %v332 = vpop.f32.mrb[0].mxu0
  %v333 = vadd.f32 0.0, %v332
  %v334 = vpop.f32.mrb[0].mxu0
  %v335 = vpop.f32.mrb[0].mxu0
  %v336 = vpop.f32.mrb[0].mxu0
  %337 = vdwg.mxu0
  %v339 = vsel %vm61, %v51, 0
  %v342 = vsel %vm61, %v59, 0
  %344 = vmatprep.subr.bf16.mxu0 0
  %345 = vmatpush1.bf16.xpose.msra.mxu0 %v342
  %346 = vmatprep.subr.bf16.mxu0 0
  %347 = vmatpush1.bf16.xpose.msra.mxu0 0
  %348 = vmatprep.subr.bf16.mxu0 0
  %349 = vmatpush1.bf16.xpose.msra.mxu0 0
  %350 = vmatprep.subr.bf16.mxu0 0
  %351 = vmatpush1.bf16.xpose.msra.mxu0 0
  %352 = vmatprep.subr.bf16.mxu0 0
  %353 = vmatpush1.bf16.xpose.msra.mxu0 0
  %354 = vmatprep.subr.bf16.mxu0 0
  %355 = vmatpush1.bf16.xpose.msra.mxu0 0
  %356 = vmatprep.subr.bf16.mxu0 0
  %357 = vmatpush1.bf16.xpose.msra.mxu0 0
  %358 = vmatprep.subr.bf16.mxu0 0
  %359 = vmatpush1.bf16.xpose.msra.mxu0 0
  %360 = vmatprep.subr.bf16.mxu0 0
  %361 = vmatpush1.bf16.xpose.msra.mxu0 0
  %362 = vmatprep.subr.bf16.mxu0 0
  %363 = vmatpush1.bf16.xpose.msra.mxu0 0
  %364 = vmatprep.subr.bf16.mxu0 0
  %365 = vmatpush1.bf16.xpose.msra.mxu0 0
  %366 = vmatprep.subr.bf16.mxu0 0
  %367 = vmatpush1.bf16.xpose.msra.mxu0 0
  %368 = vmatprep.subr.bf16.mxu0 0
  %369 = vmatpush1.bf16.xpose.msra.mxu0 0
  %370 = vmatprep.subr.bf16.mxu0 0
  %371 = vmatpush1.bf16.xpose.msra.mxu0 0
  %372 = vmatprep.subr.bf16.mxu0 0
  %373 = vmatpush1.bf16.xpose.msra.mxu0 0
  %374 = vmatprep.subr.bf16.mxu0 0
  %375 = vmatpush1.bf16.xpose.msra.mxu0 0
  %376 = vmatprep.mubr.bf16.mxu0 0
  %377 = vmatmul.mubr.bf16.gmra.mrb[0].mxu0 %v339
  %v378 = vpop.f32.mrb[0].mxu0
  %v379 = vadd.f32 0.0, %v378
  %v380 = vpop.f32.mrb[0].mxu0
  %v381 = vpop.f32.mrb[0].mxu0
  %v382 = vpop.f32.mrb[0].mxu0
  %383 = vdwg.mxu0
  %v385 = vsel %vm61, %v52, 0
  %v388 = vsel %vm61, %v60, 0
  %390 = vmatprep.subr.bf16.mxu0 0
  %391 = vmatpush1.bf16.xpose.msra.mxu0 %v388
  %392 = vmatprep.subr.bf16.mxu0 0
  %393 = vmatpush1.bf16.xpose.msra.mxu0 0
  %394 = vmatprep.subr.bf16.mxu0 0
  %395 = vmatpush1.bf16.xpose.msra.mxu0 0
  %396 = vmatprep.subr.bf16.mxu0 0
  %397 = vmatpush1.bf16.xpose.msra.mxu0 0
  %398 = vmatprep.subr.bf16.mxu0 0
  %399 = vmatpush1.bf16.xpose.msra.mxu0 0
  %400 = vmatprep.subr.bf16.mxu0 0
  %401 = vmatpush1.bf16.xpose.msra.mxu0 0
  %402 = vmatprep.subr.bf16.mxu0 0
  %403 = vmatpush1.bf16.xpose.msra.mxu0 0
  %404 = vmatprep.subr.bf16.mxu0 0
  %405 = vmatpush1.bf16.xpose.msra.mxu0 0
  %406 = vmatprep.subr.bf16.mxu0 0
  %407 = vmatpush1.bf16.xpose.msra.mxu0 0
  %408 = vmatprep.subr.bf16.mxu0 0
  %409 = vmatpush1.bf16.xpose.msra.mxu0 0
  %410 = vmatprep.subr.bf16.mxu0 0
  %411 = vmatpush1.bf16.xpose.msra.mxu0 0
  %412 = vmatprep.subr.bf16.mxu0 0
  %413 = vmatpush1.bf16.xpose.msra.mxu0 0
  %414 = vmatprep.subr.bf16.mxu0 0
  %415 = vmatpush1.bf16.xpose.msra.mxu0 0
  %416 = vmatprep.subr.bf16.mxu0 0
  %417 = vmatpush1.bf16.xpose.msra.mxu0 0
  %418 = vmatprep.subr.bf16.mxu0 0
  %419 = vmatpush1.bf16.xpose.msra.mxu0 0
  %420 = vmatprep.subr.bf16.mxu0 0
  %421 = vmatpush1.bf16.xpose.msra.mxu0 0
  %422 = vmatprep.mubr.bf16.mxu0 0
  %423 = vmatmul.mubr.bf16.gmra.mrb[0].mxu0 %v385
  %v424 = vpop.f32.mrb[0].mxu0
  %v425 = vadd.f32 0.0, %v424
  %v426 = vpop.f32.mrb[0].mxu0
  %v427 = vpop.f32.mrb[0].mxu0
  %v428 = vpop.f32.mrb[0].mxu0
  %429 = vdwg.mxu0
  %v430 = vld [vmem:[#allocation2] sm:$0xff]
  %v431 = vld [vmem:[#allocation2 + $0x8] sm:$0xff]
  %v432 = vld [vmem:[#allocation2 + $0x10] sm:$0xff]
  %v433 = vld [vmem:[#allocation2 + $0x18] sm:$0xff]
  %v434 = vld [vmem:[#allocation2 + $0x20] sm:$0xff]
  %v435 = vld [vmem:[#allocation2 + $0x28] sm:$0xff]
  %v436 = vld [vmem:[#allocation2 + $0x30] sm:$0xff]
  %v437 = vld [vmem:[#allocation2 + $0x38] sm:$0xff]
  %v438 = vsel %vm61, %v103, -inf
  %439 = vmax.xlane.f32.xlu0 %v438
  %v440 = vpop.xlane.xlu0 %439
  %v441 = vsel %vm61, %v149, -inf
  %442 = vmax.xlane.f32.xlu0 %v441
  %v443 = vpop.xlane.xlu0 %442
  %v444 = vsel %vm61, %v195, -inf
  %445 = vmax.xlane.f32.xlu0 %v444
  %v446 = vpop.xlane.xlu0 %445
  %v447 = vsel %vm61, %v241, -inf
  %448 = vmax.xlane.f32.xlu0 %v447
  %v449 = vpop.xlane.xlu0 %448
  %v450 = vsel %vm61, %v287, -inf
  %451 = vmax.xlane.f32.xlu0 %v450
  %v452 = vpop.xlane.xlu0 %451
  %v453 = vsel %vm61, %v333, -inf
  %454 = vmax.xlane.f32.xlu0 %v453
  %v455 = vpop.xlane.xlu0 %454
  %v456 = vsel %vm61, %v379, -inf
  %457 = vmax.xlane.f32.xlu0 %v456
  %v458 = vpop.xlane.xlu0 %457
  %v459 = vsel %vm61, %v425, -inf
  %460 = vmax.xlane.f32.xlu0 %v459
  %v461 = vpop.xlane.xlu0 %460
  %v462 = vmax.f32 %v430, %v440
  %v463 = vmax.f32 %v431, %v443
  %v464 = vmax.f32 %v432, %v446
  %v465 = vmax.f32 %v433, %v449
  %v466 = vmax.f32 %v434, %v452
  %v467 = vmax.f32 %v435, %v455
  %v468 = vmax.f32 %v436, %v458
  %v469 = vmax.f32 %v437, %v461
  %v470 = vsub.f32 %v430, %v462
  %v471 = vsub.f32 %v431, %v463
  %v472 = vsub.f32 %v432, %v464
  %v473 = vsub.f32 %v433, %v465
  %v474 = vsub.f32 %v434, %v466
  %v475 = vsub.f32 %v435, %v467
  %v476 = vsub.f32 %v436, %v468
  %v477 = vsub.f32 %v437, %v469
  %v478 = vmul.f32 %v470, 1.442695
  %v479 = vpow.pop %v478
  %v480 = vmul.f32 %v471, 1.442695
  %v481 = vpow.pop %v480
  %v482 = vmul.f32 %v472, 1.442695
  %v483 = vpow.pop %v482
  %v484 = vmul.f32 %v473, 1.442695
  %v485 = vpow.pop %v484
  %v486 = vmul.f32 %v474, 1.442695
  %v487 = vpow.pop %v486
  %v488 = vmul.f32 %v475, 1.442695
  %v489 = vpow.pop %v488
  %v490 = vmul.f32 %v476, 1.442695
  %v491 = vpow.pop %v490
  %v492 = vmul.f32 %v477, 1.442695
  %v493 = vpow.pop %v492
  %495 = vset.pattern.permute.xlu0 0
  %496 = vperm.xlu0 %495, %v462
  %v497 = vpop.permute.xlu0 %496
  %500 = vset.pattern.permute.xlu0 0
  %501 = vperm.xlu0 %500, %v463
  %v502 = vpop.permute.xlu0 %501
  %505 = vset.pattern.permute.xlu0 0
  %506 = vperm.xlu0 %505, %v464
  %v507 = vpop.permute.xlu0 %506
  %510 = vset.pattern.permute.xlu0 0
  %511 = vperm.xlu0 %510, %v465
  %v512 = vpop.permute.xlu0 %511
  %515 = vset.pattern.permute.xlu0 0
  %516 = vperm.xlu0 %515, %v466
  %v517 = vpop.permute.xlu0 %516
  %520 = vset.pattern.permute.xlu0 0
  %521 = vperm.xlu0 %520, %v467
  %v522 = vpop.permute.xlu0 %521
  %525 = vset.pattern.permute.xlu0 0
  %526 = vperm.xlu0 %525, %v468
  %v527 = vpop.permute.xlu0 %526
  %530 = vset.pattern.permute.xlu0 0
  %531 = vperm.xlu0 %530, %v469
  %v532 = vpop.permute.xlu0 %531
  %v534 = vsub.f32 %v103, %v497
  %v535 = vsub.f32 %v149, %v502
  %v536 = vsub.f32 %v195, %v507
  %v537 = vsub.f32 %v241, %v512
  %v538 = vsub.f32 %v287, %v517
  %v539 = vsub.f32 %v333, %v522
  %v540 = vsub.f32 %v379, %v527
  %v541 = vsub.f32 %v425, %v532
  %v542 = vmul.f32 %v534, 1.442695
  %v543 = vpow.pop %v542
  %v544 = vmul.f32 %v535, 1.442695
  %v545 = vpow.pop %v544
  %v546 = vmul.f32 %v536, 1.442695
  %v547 = vpow.pop %v546
  %v548 = vmul.f32 %v537, 1.442695
  %v549 = vpow.pop %v548
  %v550 = vmul.f32 %v538, 1.442695
  %v551 = vpow.pop %v550
  %v552 = vmul.f32 %v539, 1.442695
  %v553 = vpow.pop %v552
  %v554 = vmul.f32 %v540, 1.442695
  %v555 = vpow.pop %v554
  %v556 = vmul.f32 %v541, 1.442695
  %v557 = vpow.pop %v556
  %v558 = vld [vmem:[#allocation3] sm:$0xff]
  %v559 = vld [vmem:[#allocation3 + $0x8] sm:$0xff]
  %v560 = vld [vmem:[#allocation3 + $0x10] sm:$0xff]
  %v561 = vld [vmem:[#allocation3 + $0x18] sm:$0xff]
  %v562 = vld [vmem:[#allocation3 + $0x20] sm:$0xff]
  %v563 = vld [vmem:[#allocation3 + $0x28] sm:$0xff]
  %v564 = vld [vmem:[#allocation3 + $0x30] sm:$0xff]
  %v565 = vld [vmem:[#allocation3 + $0x38] sm:$0xff]
  %v566 = vmul.f32 %v479, %v558
  %v567 = vmul.f32 %v481, %v559
  %v568 = vmul.f32 %v483, %v560
  %v569 = vmul.f32 %v485, %v561
  %v570 = vmul.f32 %v487, %v562
  %v571 = vmul.f32 %v489, %v563
  %v572 = vmul.f32 %v491, %v564
  %v573 = vmul.f32 %v493, %v565
  %v574 = vsel %vm61, %v543, 0.0
  %575 = vadd.xlane.f32.xlu0 %v574
  %v576 = vpop.xlane.xlu0 %575
  %v577 = vsel %vm61, %v545, 0.0
  %578 = vadd.xlane.f32.xlu0 %v577
  %v579 = vpop.xlane.xlu0 %578
  %v580 = vsel %vm61, %v547, 0.0
  %581 = vadd.xlane.f32.xlu0 %v580
  %v582 = vpop.xlane.xlu0 %581
  %v583 = vsel %vm61, %v549, 0.0
  %584 = vadd.xlane.f32.xlu0 %v583
  %v585 = vpop.xlane.xlu0 %584
  %v586 = vsel %vm61, %v551, 0.0
  %587 = vadd.xlane.f32.xlu0 %v586
  %v588 = vpop.xlane.xlu0 %587
  %v589 = vsel %vm61, %v553, 0.0
  %590 = vadd.xlane.f32.xlu0 %v589
  %v591 = vpop.xlane.xlu0 %590
  %v592 = vsel %vm61, %v555, 0.0
  %593 = vadd.xlane.f32.xlu0 %v592
  %v594 = vpop.xlane.xlu0 %593
  %v595 = vsel %vm61, %v557, 0.0
  %596 = vadd.xlane.f32.xlu0 %v595
  %v597 = vpop.xlane.xlu0 %596
  %v598 = vadd.f32 %v566, %v576
  %v599 = vadd.f32 %v567, %v579
  %v600 = vadd.f32 %v568, %v582
  %v601 = vadd.f32 %v569, %v585
  %v602 = vadd.f32 %v570, %v588
  %v603 = vadd.f32 %v571, %v591
  %v604 = vadd.f32 %v572, %v594
  %v605 = vadd.f32 %v573, %v597
  %vm606 = vcmask 7168
  %607 = vst.msk [vmem:[#allocation3] sm:$0xff] %vm606, %v598
  %608 = vst.msk [vmem:[#allocation3 + $0x8] sm:$0xff] %vm606, %v599
  %609 = vst.msk [vmem:[#allocation3 + $0x10] sm:$0xff] %vm606, %v600
  %610 = vst.msk [vmem:[#allocation3 + $0x18] sm:$0xff] %vm606, %v601
  %611 = vst.msk [vmem:[#allocation3 + $0x20] sm:$0xff] %vm606, %v602
  %612 = vst.msk [vmem:[#allocation3 + $0x28] sm:$0xff] %vm606, %v603
  %613 = vst.msk [vmem:[#allocation3 + $0x30] sm:$0xff] %vm606, %v604
  %614 = vst.msk [vmem:[#allocation3 + $0x38] sm:$0xff] %vm606, %v605
  %v615 = vld [vmem:[#allocation4] sm:$0xff]
  %v616 = vld [vmem:[#allocation4 + $0x8] sm:$0xff]
  %v617 = vld [vmem:[#allocation4 + $0x10] sm:$0xff]
  %v618 = vld [vmem:[#allocation4 + $0x18] sm:$0xff]
  %v619 = vld [vmem:[#allocation4 + $0x20] sm:$0xff]
  %v620 = vld [vmem:[#allocation4 + $0x28] sm:$0xff]
  %v621 = vld [vmem:[#allocation4 + $0x30] sm:$0xff]
  %v622 = vld [vmem:[#allocation4 + $0x38] sm:$0xff]
  %624 = vset.pattern.permute.xlu0 0
  %625 = vperm.xlu0 %624, %v479
  %v626 = vpop.permute.xlu0 %625
  %629 = vset.pattern.permute.xlu0 0
  %630 = vperm.xlu0 %629, %v481
  %v631 = vpop.permute.xlu0 %630
  %634 = vset.pattern.permute.xlu0 0
  %635 = vperm.xlu0 %634, %v483
  %v636 = vpop.permute.xlu0 %635
  %639 = vset.pattern.permute.xlu0 0
  %640 = vperm.xlu0 %639, %v485
  %v641 = vpop.permute.xlu0 %640
  %644 = vset.pattern.permute.xlu0 0
  %645 = vperm.xlu0 %644, %v487
  %v646 = vpop.permute.xlu0 %645
  %649 = vset.pattern.permute.xlu0 0
  %650 = vperm.xlu0 %649, %v489
  %v651 = vpop.permute.xlu0 %650
  %654 = vset.pattern.permute.xlu0 0
  %655 = vperm.xlu0 %654, %v491
  %v656 = vpop.permute.xlu0 %655
  %659 = vset.pattern.permute.xlu0 0
  %660 = vperm.xlu0 %659, %v493
  %v661 = vpop.permute.xlu0 %660
  %v663 = vmul.f32 %v626, %v615
  %v664 = vmul.f32 %v631, %v616
  %v665 = vmul.f32 %v636, %v617
  %v666 = vmul.f32 %v641, %v618
  %v667 = vmul.f32 %v646, %v619
  %v668 = vmul.f32 %v651, %v620
  %v669 = vmul.f32 %v656, %v621
  %v670 = vmul.f32 %v661, %v622
  %v671 = vpack.c.bf16 %v543, %v543
  %v672 = vpack.c.bf16 %v545, %v545
  %v673 = vpack.c.bf16 %v547, %v547
  %v674 = vpack.c.bf16 %v549, %v549
  %v675 = vpack.c.bf16 %v551, %v551
  %v676 = vpack.c.bf16 %v553, %v553
  %v677 = vpack.c.bf16 %v555, %v555
  %v678 = vpack.c.bf16 %v557, %v557
  %v679 = vld [vmem:[%s2] sm:$0xf]
  %v680 = vld [vmem:[%s2 + $0x4] sm:$0xf]
  %v681 = vld [vmem:[%s2 + $0x8] sm:$0xf]
  %v682 = vld [vmem:[%s2 + $0xc] sm:$0xf]
  %v683 = vld [vmem:[%s2 + $0x10] sm:$0xf]
  %v684 = vld [vmem:[%s2 + $0x14] sm:$0xf]
  %v685 = vld [vmem:[%s2 + $0x18] sm:$0xf]
  %v686 = vld [vmem:[%s2 + $0x1c] sm:$0xf]
  %v688 = vsel %vm61, %v671, 0
  %vm690 = vcmask 1043456
  %v692 = vsel %vm690, %v679, 0
  %694 = vmatprep.subr.bf16.mxu0 0
  %695 = vmatpush1.bf16.msra.mxu0 %v692
  %696 = vmatprep.subr.bf16.mxu0 0
  %697 = vmatpush1.bf16.msra.mxu0 0
  %698 = vmatprep.subr.bf16.mxu0 0
  %699 = vmatpush1.bf16.msra.mxu0 0
  %700 = vmatprep.subr.bf16.mxu0 0
  %701 = vmatpush1.bf16.msra.mxu0 0
  %702 = vmatprep.subr.bf16.mxu0 0
  %703 = vmatpush1.bf16.msra.mxu0 0
  %704 = vmatprep.subr.bf16.mxu0 0
  %705 = vmatpush1.bf16.msra.mxu0 0
  %706 = vmatprep.subr.bf16.mxu0 0
  %707 = vmatpush1.bf16.msra.mxu0 0
  %708 = vmatprep.subr.bf16.mxu0 0
  %709 = vmatpush1.bf16.msra.mxu0 0
  %710 = vmatprep.subr.bf16.mxu0 0
  %711 = vmatpush1.bf16.msra.mxu0 0
  %712 = vmatprep.subr.bf16.mxu0 0
  %713 = vmatpush1.bf16.msra.mxu0 0
  %714 = vmatprep.subr.bf16.mxu0 0
  %715 = vmatpush1.bf16.msra.mxu0 0
  %716 = vmatprep.subr.bf16.mxu0 0
  %717 = vmatpush1.bf16.msra.mxu0 0
  %718 = vmatprep.subr.bf16.mxu0 0
  %719 = vmatpush1.bf16.msra.mxu0 0
  %720 = vmatprep.subr.bf16.mxu0 0
  %721 = vmatpush1.bf16.msra.mxu0 0
  %722 = vmatprep.subr.bf16.mxu0 0
  %723 = vmatpush1.bf16.msra.mxu0 0
  %724 = vmatprep.subr.bf16.mxu0 0
  %725 = vmatpush1.bf16.msra.mxu0 0
  %726 = vmatprep.mubr.bf16.mxu0 0
  %727 = vmatmul.mubr.bf16.gmra.mrb[0].mxu0 %v688
  %v728 = vpop.f32.mrb[0].mxu0
  %v729 = vadd.f32 0.0, %v728
  %v730 = vpop.f32.mrb[0].mxu0
  %v731 = vpop.f32.mrb[0].mxu0
  %v732 = vpop.f32.mrb[0].mxu0
  %733 = vdwg.mxu0
  %v735 = vsel %vm61, %v672, 0
  %v738 = vsel %vm690, %v680, 0
  %740 = vmatprep.subr.bf16.mxu0 0
  %741 = vmatpush1.bf16.msra.mxu0 %v738
  %742 = vmatprep.subr.bf16.mxu0 0
  %743 = vmatpush1.bf16.msra.mxu0 0
  %744 = vmatprep.subr.bf16.mxu0 0
  %745 = vmatpush1.bf16.msra.mxu0 0
  %746 = vmatprep.subr.bf16.mxu0 0
  %747 = vmatpush1.bf16.msra.mxu0 0
  %748 = vmatprep.subr.bf16.mxu0 0
  %749 = vmatpush1.bf16.msra.mxu0 0
  %750 = vmatprep.subr.bf16.mxu0 0
  %751 = vmatpush1.bf16.msra.mxu0 0
  %752 = vmatprep.subr.bf16.mxu0 0
  %753 = vmatpush1.bf16.msra.mxu0 0
  %754 = vmatprep.subr.bf16.mxu0 0
  %755 = vmatpush1.bf16.msra.mxu0 0
  %756 = vmatprep.subr.bf16.mxu0 0
  %757 = vmatpush1.bf16.msra.mxu0 0
  %758 = vmatprep.subr.bf16.mxu0 0
  %759 = vmatpush1.bf16.msra.mxu0 0
  %760 = vmatprep.subr.bf16.mxu0 0
  %761 = vmatpush1.bf16.msra.mxu0 0
  %762 = vmatprep.subr.bf16.mxu0 0
  %763 = vmatpush1.bf16.msra.mxu0 0
  %764 = vmatprep.subr.bf16.mxu0 0
  %765 = vmatpush1.bf16.msra.mxu0 0
  %766 = vmatprep.subr.bf16.mxu0 0
  %767 = vmatpush1.bf16.msra.mxu0 0
  %768 = vmatprep.subr.bf16.mxu0 0
  %769 = vmatpush1.bf16.msra.mxu0 0
  %770 = vmatprep.subr.bf16.mxu0 0
  %771 = vmatpush1.bf16.msra.mxu0 0
  %772 = vmatprep.mubr.bf16.mxu0 0
  %773 = vmatmul.mubr.bf16.gmra.mrb[0].mxu0 %v735
  %v774 = vpop.f32.mrb[0].mxu0
  %v775 = vadd.f32 0.0, %v774
  %v776 = vpop.f32.mrb[0].mxu0
  %v777 = vpop.f32.mrb[0].mxu0
  %v778 = vpop.f32.mrb[0].mxu0
  %779 = vdwg.mxu0
  %v781 = vsel %vm61, %v673, 0
  %v784 = vsel %vm690, %v681, 0
  %786 = vmatprep.subr.bf16.mxu0 0
  %787 = vmatpush1.bf16.msra.mxu0 %v784
  %788 = vmatprep.subr.bf16.mxu0 0
  %789 = vmatpush1.bf16.msra.mxu0 0
  %790 = vmatprep.subr.bf16.mxu0 0
  %791 = vmatpush1.bf16.msra.mxu0 0
  %792 = vmatprep.subr.bf16.mxu0 0
  %793 = vmatpush1.bf16.msra.mxu0 0
  %794 = vmatprep.subr.bf16.mxu0 0
  %795 = vmatpush1.bf16.msra.mxu0 0
  %796 = vmatprep.subr.bf16.mxu0 0
  %797 = vmatpush1.bf16.msra.mxu0 0
  %798 = vmatprep.subr.bf16.mxu0 0
  %799 = vmatpush1.bf16.msra.mxu0 0
  %800 = vmatprep.subr.bf16.mxu0 0
  %801 = vmatpush1.bf16.msra.mxu0 0
  %802 = vmatprep.subr.bf16.mxu0 0
  %803 = vmatpush1.bf16.msra.mxu0 0
  %804 = vmatprep.subr.bf16.mxu0 0
  %805 = vmatpush1.bf16.msra.mxu0 0
  %806 = vmatprep.subr.bf16.mxu0 0
  %807 = vmatpush1.bf16.msra.mxu0 0
  %808 = vmatprep.subr.bf16.mxu0 0
  %809 = vmatpush1.bf16.msra.mxu0 0
  %810 = vmatprep.subr.bf16.mxu0 0
  %811 = vmatpush1.bf16.msra.mxu0 0
  %812 = vmatprep.subr.bf16.mxu0 0
  %813 = vmatpush1.bf16.msra.mxu0 0
  %814 = vmatprep.subr.bf16.mxu0 0
  %815 = vmatpush1.bf16.msra.mxu0 0
  %816 = vmatprep.subr.bf16.mxu0 0
  %817 = vmatpush1.bf16.msra.mxu0 0
  %818 = vmatprep.mubr.bf16.mxu0 0
  %819 = vmatmul.mubr.bf16.gmra.mrb[0].mxu0 %v781
  %v820 = vpop.f32.mrb[0].mxu0
  %v821 = vadd.f32 0.0, %v820
  %v822 = vpop.f32.mrb[0].mxu0
  %v823 = vpop.f32.mrb[0].mxu0
  %v824 = vpop.f32.mrb[0].mxu0
  %825 = vdwg.mxu0
  %v827 = vsel %vm61, %v674, 0
  %v830 = vsel %vm690, %v682, 0
  %832 = vmatprep.subr.bf16.mxu0 0
  %833 = vmatpush1.bf16.msra.mxu0 %v830
  %834 = vmatprep.subr.bf16.mxu0 0
  %835 = vmatpush1.bf16.msra.mxu0 0
  %836 = vmatprep.subr.bf16.mxu0 0
  %837 = vmatpush1.bf16.msra.mxu0 0
  %838 = vmatprep.subr.bf16.mxu0 0
  %839 = vmatpush1.bf16.msra.mxu0 0
  %840 = vmatprep.subr.bf16.mxu0 0
  %841 = vmatpush1.bf16.msra.mxu0 0
  %842 = vmatprep.subr.bf16.mxu0 0
  %843 = vmatpush1.bf16.msra.mxu0 0
  %844 = vmatprep.subr.bf16.mxu0 0
  %845 = vmatpush1.bf16.msra.mxu0 0
  %846 = vmatprep.subr.bf16.mxu0 0
  %847 = vmatpush1.bf16.msra.mxu0 0
  %848 = vmatprep.subr.bf16.mxu0 0
  %849 = vmatpush1.bf16.msra.mxu0 0
  %850 = vmatprep.subr.bf16.mxu0 0
  %851 = vmatpush1.bf16.msra.mxu0 0
  %852 = vmatprep.subr.bf16.mxu0 0
  %853 = vmatpush1.bf16.msra.mxu0 0
  %854 = vmatprep.subr.bf16.mxu0 0
  %855 = vmatpush1.bf16.msra.mxu0 0
  %856 = vmatprep.subr.bf16.mxu0 0
  %857 = vmatpush1.bf16.msra.mxu0 0
  %858 = vmatprep.subr.bf16.mxu0 0
  %859 = vmatpush1.bf16.msra.mxu0 0
  %860 = vmatprep.subr.bf16.mxu0 0
  %861 = vmatpush1.bf16.msra.mxu0 0
  %862 = vmatprep.subr.bf16.mxu0 0
  %863 = vmatpush1.bf16.msra.mxu0 0
  %864 = vmatprep.mubr.bf16.mxu0 0
  %865 = vmatmul.mubr.bf16.gmra.mrb[0].mxu0 %v827
  %v866 = vpop.f32.mrb[0].mxu0
  %v867 = vadd.f32 0.0, %v866
  %v868 = vpop.f32.mrb[0].mxu0
  %v869 = vpop.f32.mrb[0].mxu0
  %v870 = vpop.f32.mrb[0].mxu0
  %871 = vdwg.mxu0
  %v873 = vsel %vm61, %v675, 0
  %v876 = vsel %vm690, %v683, 0
  %878 = vmatprep.subr.bf16.mxu0 0
  %879 = vmatpush1.bf16.msra.mxu0 %v876
  %880 = vmatprep.subr.bf16.mxu0 0
  %881 = vmatpush1.bf16.msra.mxu0 0
  %882 = vmatprep.subr.bf16.mxu0 0
  %883 = vmatpush1.bf16.msra.mxu0 0
  %884 = vmatprep.subr.bf16.mxu0 0
  %885 = vmatpush1.bf16.msra.mxu0 0
  %886 = vmatprep.subr.bf16.mxu0 0
  %887 = vmatpush1.bf16.msra.mxu0 0
  %888 = vmatprep.subr.bf16.mxu0 0
  %889 = vmatpush1.bf16.msra.mxu0 0
  %890 = vmatprep.subr.bf16.mxu0 0
  %891 = vmatpush1.bf16.msra.mxu0 0
  %892 = vmatprep.subr.bf16.mxu0 0
  %893 = vmatpush1.bf16.msra.mxu0 0
  %894 = vmatprep.subr.bf16.mxu0 0
  %895 = vmatpush1.bf16.msra.mxu0 0
  %896 = vmatprep.subr.bf16.mxu0 0
  %897 = vmatpush1.bf16.msra.mxu0 0
  %898 = vmatprep.subr.bf16.mxu0 0
  %899 = vmatpush1.bf16.msra.mxu0 0
  %900 = vmatprep.subr.bf16.mxu0 0
  %901 = vmatpush1.bf16.msra.mxu0 0
  %902 = vmatprep.subr.bf16.mxu0 0
  %903 = vmatpush1.bf16.msra.mxu0 0
  %904 = vmatprep.subr.bf16.mxu0 0
  %905 = vmatpush1.bf16.msra.mxu0 0
  %906 = vmatprep.subr.bf16.mxu0 0
  %907 = vmatpush1.bf16.msra.mxu0 0
  %908 = vmatprep.subr.bf16.mxu0 0
  %909 = vmatpush1.bf16.msra.mxu0 0
  %910 = vmatprep.mubr.bf16.mxu0 0
  %911 = vmatmul.mubr.bf16.gmra.mrb[0].mxu0 %v873
  %v912 = vpop.f32.mrb[0].mxu0
  %v913 = vadd.f32 0.0, %v912
  %v914 = vpop.f32.mrb[0].mxu0
  %v915 = vpop.f32.mrb[0].mxu0
  %v916 = vpop.f32.mrb[0].mxu0
  %917 = vdwg.mxu0
  %v919 = vsel %vm61, %v676, 0
  %v922 = vsel %vm690, %v684, 0
  %924 = vmatprep.subr.bf16.mxu0 0
  %925 = vmatpush1.bf16.msra.mxu0 %v922
  %926 = vmatprep.subr.bf16.mxu0 0
  %927 = vmatpush1.bf16.msra.mxu0 0
  %928 = vmatprep.subr.bf16.mxu0 0
  %929 = vmatpush1.bf16.msra.mxu0 0
  %930 = vmatprep.subr.bf16.mxu0 0
  %931 = vmatpush1.bf16.msra.mxu0 0
  %932 = vmatprep.subr.bf16.mxu0 0
  %933 = vmatpush1.bf16.msra.mxu0 0
  %934 = vmatprep.subr.bf16.mxu0 0
  %935 = vmatpush1.bf16.msra.mxu0 0
  %936 = vmatprep.subr.bf16.mxu0 0
  %937 = vmatpush1.bf16.msra.mxu0 0
  %938 = vmatprep.subr.bf16.mxu0 0
  %939 = vmatpush1.bf16.msra.mxu0 0
  %940 = vmatprep.subr.bf16.mxu0 0
  %941 = vmatpush1.bf16.msra.mxu0 0
  %942 = vmatprep.subr.bf16.mxu0 0
  %943 = vmatpush1.bf16.msra.mxu0 0
  %944 = vmatprep.subr.bf16.mxu0 0
  %945 = vmatpush1.bf16.msra.mxu0 0
  %946 = vmatprep.subr.bf16.mxu0 0
  %947 = vmatpush1.bf16.msra.mxu0 0
  %948 = vmatprep.subr.bf16.mxu0 0
  %949 = vmatpush1.bf16.msra.mxu0 0
  %950 = vmatprep.subr.bf16.mxu0 0
  %951 = vmatpush1.bf16.msra.mxu0 0
  %952 = vmatprep.subr.bf16.mxu0 0
  %953 = vmatpush1.bf16.msra.mxu0 0
  %954 = vmatprep.subr.bf16.mxu0 0
  %955 = vmatpush1.bf16.msra.mxu0 0
  %956 = vmatprep.mubr.bf16.mxu0 0
  %957 = vmatmul.mubr.bf16.gmra.mrb[0].mxu0 %v919
  %v958 = vpop.f32.mrb[0].mxu0
  %v959 = vadd.f32 0.0, %v958
  %v960 = vpop.f32.mrb[0].mxu0
  %v961 = vpop.f32.mrb[0].mxu0
  %v962 = vpop.f32.mrb[0].mxu0
  %963 = vdwg.mxu0
  %v965 = vsel %vm61, %v677, 0
  %v968 = vsel %vm690, %v685, 0
  %970 = vmatprep.subr.bf16.mxu0 0
  %971 = vmatpush1.bf16.msra.mxu0 %v968
  %972 = vmatprep.subr.bf16.mxu0 0
  %973 = vmatpush1.bf16.msra.mxu0 0
  %974 = vmatprep.subr.bf16.mxu0 0
  %975 = vmatpush1.bf16.msra.mxu0 0
  %976 = vmatprep.subr.bf16.mxu0 0
  %977 = vmatpush1.bf16.msra.mxu0 0
  %978 = vmatprep.subr.bf16.mxu0 0
  %979 = vmatpush1.bf16.msra.mxu0 0
  %980 = vmatprep.subr.bf16.mxu0 0
  %981 = vmatpush1.bf16.msra.mxu0 0
  %982 = vmatprep.subr.bf16.mxu0 0
  %983 = vmatpush1.bf16.msra.mxu0 0
  %984 = vmatprep.subr.bf16.mxu0 0
  %985 = vmatpush1.bf16.msra.mxu0 0
  %986 = vmatprep.subr.bf16.mxu0 0
  %987 = vmatpush1.bf16.msra.mxu0 0
  %988 = vmatprep.subr.bf16.mxu0 0
  %989 = vmatpush1.bf16.msra.mxu0 0
  %990 = vmatprep.subr.bf16.mxu0 0
  %991 = vmatpush1.bf16.msra.mxu0 0
  %992 = vmatprep.subr.bf16.mxu0 0
  %993 = vmatpush1.bf16.msra.mxu0 0
  %994 = vmatprep.subr.bf16.mxu0 0
  %995 = vmatpush1.bf16.msra.mxu0 0
  %996 = vmatprep.subr.bf16.mxu0 0
  %997 = vmatpush1.bf16.msra.mxu0 0
  %998 = vmatprep.subr.bf16.mxu0 0
  %999 = vmatpush1.bf16.msra.mxu0 0
  %1000 = vmatprep.subr.bf16.mxu0 0
  %1001 = vmatpush1.bf16.msra.mxu0 0
  %1002 = vmatprep.mubr.bf16.mxu0 0
  %1003 = vmatmul.mubr.bf16.gmra.mrb[0].mxu0 %v965
  %v1004 = vpop.f32.mrb[0].mxu0
  %v1005 = vadd.f32 0.0, %v1004
  %v1006 = vpop.f32.mrb[0].mxu0
  %v1007 = vpop.f32.mrb[0].mxu0
  %v1008 = vpop.f32.mrb[0].mxu0
  %1009 = vdwg.mxu0
  %v1011 = vsel %vm61, %v678, 0
  %v1014 = vsel %vm690, %v686, 0
  %1016 = vmatprep.subr.bf16.mxu0 0
  %1017 = vmatpush1.bf16.msra.mxu0 %v1014
  %1018 = vmatprep.subr.bf16.mxu0 0
  %1019 = vmatpush1.bf16.msra.mxu0 0
  %1020 = vmatprep.subr.bf16.mxu0 0
  %1021 = vmatpush1.bf16.msra.mxu0 0
  %1022 = vmatprep.subr.bf16.mxu0 0
  %1023 = vmatpush1.bf16.msra.mxu0 0
  %1024 = vmatprep.subr.bf16.mxu0 0
  %1025 = vmatpush1.bf16.msra.mxu0 0
  %1026 = vmatprep.subr.bf16.mxu0 0
  %1027 = vmatpush1.bf16.msra.mxu0 0
  %1028 = vmatprep.subr.bf16.mxu0 0
  %1029 = vmatpush1.bf16.msra.mxu0 0
  %1030 = vmatprep.subr.bf16.mxu0 0
  %1031 = vmatpush1.bf16.msra.mxu0 0
  %1032 = vmatprep.subr.bf16.mxu0 0
  %1033 = vmatpush1.bf16.msra.mxu0 0
  %1034 = vmatprep.subr.bf16.mxu0 0
  %1035 = vmatpush1.bf16.msra.mxu0 0
  %1036 = vmatprep.subr.bf16.mxu0 0
  %1037 = vmatpush1.bf16.msra.mxu0 0
  %1038 = vmatprep.subr.bf16.mxu0 0
  %1039 = vmatpush1.bf16.msra.mxu0 0
  %1040 = vmatprep.subr.bf16.mxu0 0
  %1041 = vmatpush1.bf16.msra.mxu0 0
  %1042 = vmatprep.subr.bf16.mxu0 0
  %1043 = vmatpush1.bf16.msra.mxu0 0
  %1044 = vmatprep.subr.bf16.mxu0 0
  %1045 = vmatpush1.bf16.msra.mxu0 0
  %1046 = vmatprep.subr.bf16.mxu0 0
  %1047 = vmatpush1.bf16.msra.mxu0 0
  %1048 = vmatprep.mubr.bf16.mxu0 0
  %1049 = vmatmul.mubr.bf16.gmra.mrb[0].mxu0 %v1011
  %v1050 = vpop.f32.mrb[0].mxu0
  %v1051 = vadd.f32 0.0, %v1050
  %v1052 = vpop.f32.mrb[0].mxu0
  %v1053 = vpop.f32.mrb[0].mxu0
  %v1054 = vpop.f32.mrb[0].mxu0
  %1055 = vdwg.mxu0
  %v1056 = vadd.f32 %v663, %v729
  %v1057 = vadd.f32 %v664, %v775
  %v1058 = vadd.f32 %v665, %v821
  %v1059 = vadd.f32 %v666, %v867
  %v1060 = vadd.f32 %v667, %v913
  %v1061 = vadd.f32 %v668, %v959
  %v1062 = vadd.f32 %v669, %v1005
  %v1063 = vadd.f32 %v670, %v1051
  %1064 = vst.msk [vmem:[#allocation4] sm:$0xff] %vm61, %v1056
  %1065 = vst.msk [vmem:[#allocation4 + $0x8] sm:$0xff] %vm61, %v1057
  %1066 = vst.msk [vmem:[#allocation4 + $0x10] sm:$0xff] %vm61, %v1058
  %1067 = vst.msk [vmem:[#allocation4 + $0x18] sm:$0xff] %vm61, %v1059
  %1068 = vst.msk [vmem:[#allocation4 + $0x20] sm:$0xff] %vm61, %v1060
  %1069 = vst.msk [vmem:[#allocation4 + $0x28] sm:$0xff] %vm61, %v1061
  %1070 = vst.msk [vmem:[#allocation4 + $0x30] sm:$0xff] %vm61, %v1062
  %1071 = vst.msk [vmem:[#allocation4 + $0x38] sm:$0xff] %vm61, %v1063
  %1072 = vst.msk [vmem:[#allocation2] sm:$0xff] %vm606, %v462
  %1073 = vst.msk [vmem:[#allocation2 + $0x8] sm:$0xff] %vm606, %v463
  %1074 = vst.msk [vmem:[#allocation2 + $0x10] sm:$0xff] %vm606, %v464
  %1075 = vst.msk [vmem:[#allocation2 + $0x18] sm:$0xff] %vm606, %v465
  %1076 = vst.msk [vmem:[#allocation2 + $0x20] sm:$0xff] %vm606, %v466
  %1077 = vst.msk [vmem:[#allocation2 + $0x28] sm:$0xff] %vm606, %v467
  %1078 = vst.msk [vmem:[#allocation2 + $0x30] sm:$0xff] %vm606, %v468
  %1079 = vst.msk [vmem:[#allocation2 + $0x38] sm:$0xff] %vm606, %v469
  // Predicated region
  $region18: #{self_attention_forward.4} parent=0 // pred_check
    %p1080 = pneg %p15
  $region19: #{self_attention_forward.4} parent=0 // pred_check_branch
    %1082 = sbr.rel (%p1080) target = $region21
  $region20: #{self_attention_forward.4} parent=0 // pred_region
    %v1083 = vld [vmem:[#allocation4] sm:$0xff]
    %v1084 = vld [vmem:[#allocation4 + $0x8] sm:$0xff]
    %v1085 = vld [vmem:[#allocation4 + $0x10] sm:$0xff]
    %v1086 = vld [vmem:[#allocation4 + $0x18] sm:$0xff]
    %v1087 = vld [vmem:[#allocation4 + $0x20] sm:$0xff]
    %v1088 = vld [vmem:[#allocation4 + $0x28] sm:$0xff]
    %v1089 = vld [vmem:[#allocation4 + $0x30] sm:$0xff]
    %v1090 = vld [vmem:[#allocation4 + $0x38] sm:$0xff]
    %v1091 = vld [vmem:[#allocation3] sm:$0xff]
    %v1092 = vld [vmem:[#allocation3 + $0x8] sm:$0xff]
    %v1093 = vld [vmem:[#allocation3 + $0x10] sm:$0xff]
    %v1094 = vld [vmem:[#allocation3 + $0x18] sm:$0xff]
    %v1095 = vld [vmem:[#allocation3 + $0x20] sm:$0xff]
    %v1096 = vld [vmem:[#allocation3 + $0x28] sm:$0xff]
    %v1097 = vld [vmem:[#allocation3 + $0x30] sm:$0xff]
    %v1098 = vld [vmem:[#allocation3 + $0x38] sm:$0xff]
    %v1099 = vrcp.pop %v1091
    %v1100 = vrcp.pop %v1092
    %v1101 = vrcp.pop %v1093
    %v1102 = vrcp.pop %v1094
    %v1103 = vrcp.pop %v1095
    %v1104 = vrcp.pop %v1096
    %v1105 = vrcp.pop %v1097
    %v1106 = vrcp.pop %v1098
    %1108 = vset.pattern.permute.xlu0 0
    %1109 = vperm.xlu0 %1108, %v1099
    %v1110 = vpop.permute.xlu0 %1109
    %1113 = vset.pattern.permute.xlu0 0
    %1114 = vperm.xlu0 %1113, %v1100
    %v1115 = vpop.permute.xlu0 %1114
    %1118 = vset.pattern.permute.xlu0 0
    %1119 = vperm.xlu0 %1118, %v1101
    %v1120 = vpop.permute.xlu0 %1119
    %1123 = vset.pattern.permute.xlu0 0
    %1124 = vperm.xlu0 %1123, %v1102
    %v1125 = vpop.permute.xlu0 %1124
    %1128 = vset.pattern.permute.xlu0 0
    %1129 = vperm.xlu0 %1128, %v1103
    %v1130 = vpop.permute.xlu0 %1129
    %1133 = vset.pattern.permute.xlu0 0
    %1134 = vperm.xlu0 %1133, %v1104
    %v1135 = vpop.permute.xlu0 %1134
    %1138 = vset.pattern.permute.xlu0 0
    %1139 = vperm.xlu0 %1138, %v1105
    %v1140 = vpop.permute.xlu0 %1139
    %1143 = vset.pattern.permute.xlu0 0
    %1144 = vperm.xlu0 %1143, %v1106
    %v1145 = vpop.permute.xlu0 %1144
    %v1147 = vmul.f32 %v1083, %v1110
    %v1148 = vmul.f32 %v1084, %v1115
    %v1149 = vmul.f32 %v1085, %v1120
    %v1150 = vmul.f32 %v1086, %v1125
    %v1151 = vmul.f32 %v1087, %v1130
    %v1152 = vmul.f32 %v1088, %v1135
    %v1153 = vmul.f32 %v1089, %v1140
    %v1154 = vmul.f32 %v1090, %v1145
    %v1155 = vpack.c.bf16 %v1147, %v1147
    %v1156 = vpack.c.bf16 %v1148, %v1148
    %v1157 = vpack.c.bf16 %v1149, %v1149
    %v1158 = vpack.c.bf16 %v1150, %v1150
    %v1159 = vpack.c.bf16 %v1151, %v1151
    %v1160 = vpack.c.bf16 %v1152, %v1152
    %v1161 = vpack.c.bf16 %v1153, %v1153
    %v1162 = vpack.c.bf16 %v1154, %v1154
    %vm1163 = vcmask 60416
    %1164 = vst.msk [vmem:[%s3] sm:$0xf] %vm1163, %v1155
    %1165 = vst.msk [vmem:[%s3 + $0x4] sm:$0xf] %vm1163, %v1156
    %1166 = vst.msk [vmem:[%s3 + $0x8] sm:$0xf] %vm1163, %v1157
    %1167 = vst.msk [vmem:[%s3 + $0xc] sm:$0xf] %vm1163, %v1158
    %1168 = vst.msk [vmem:[%s3 + $0x10] sm:$0xf] %vm1163, %v1159
    %1169 = vst.msk [vmem:[%s3 + $0x14] sm:$0xf] %vm1163, %v1160
    %1170 = vst.msk [vmem:[%s3 + $0x18] sm:$0xf] %vm1163, %v1161
    %1171 = vst.msk [vmem:[%s3 + $0x1c] sm:$0xf] %vm1163, %v1162
  $region21: #{self_attention_forward.4} parent=0 // pred_fallthru
    _
  // Predicated region
  $region22: #{self_attention_forward.4} parent=0 // pred_check
    _
  $region23: #{self_attention_forward.4} parent=0 // pred_check_branch
    %1173 = sbr.rel (0) target = $region25
  $region24: #{self_attention_forward.4} parent=0 // pred_region
    _
  $region25: #{self_attention_forward.4} parent=0 // pred_fallthru
    _
  // Predicated region
  $region26: #{self_attention_forward.4} parent=0 // pred_check
    _
  $region27: #{self_attention_forward.4} parent=0 // pred_check_branch
    %1175 = sbr.rel (0) target = $region29
  $region28: #{self_attention_forward.4} parent=0 // pred_region
    _
  $region29: #{self_attention_forward.4} parent=0 // pred_fallthru
    _

</llo_original>
